<compile_context>
chip_gen: v5e
topology: v5e:2x2
jax: 0.10.0
libtpu: 0.0.40
codegen_flags: <defaults>
</compile_context>

<pallas_src>
import jax
import jax.numpy as jnp
from jax.experimental import pallas as pl
from jax.experimental.pallas import tpu as pltpu

# Logical / padded dimensions ------------------------------------------------
D_IN = 784                       # kept unpadded end-to-end (x block = full last dim)
H, H_P = 200, 256                # hidden width padded to 2 * 128
L, L_P = 50, 128                 # latent padded to a full 128-lane group
LAT_W = 2 * L_P                  # fused [mu_pad || logstd_pad] slab width = 256


def vae_forward_kernel(
    x_ref, eps_ref,
    w1_ref, b1_ref,
    w2_ref, b2_ref,
    w3_ref, b3_ref,      # fused fc31||fc32
    w4_ref, b4_ref,
    w5_ref, b5_ref,
    w6_ref, b6_ref,
    dec_ref, lat_ref,
):
    x = x_ref[...].astype(jnp.bfloat16)     # (TB, 784) cast in-kernel (no wrapper pad pass)
    eps = eps_ref[...]                      # (TB, 128) f32, zero beyond col 50

    def lin(h_bf16, w_ref, b_ref):
        return (jnp.dot(h_bf16, w_ref[...], preferred_element_type=jnp.float32)
                + b_ref[...])

    # --- encode ---
    h1 = jnp.tanh(lin(x, w1_ref, b1_ref)).astype(jnp.bfloat16)      # (TB, 256)
    h2 = jnp.tanh(lin(h1, w2_ref, b2_ref)).astype(jnp.bfloat16)     # (TB, 256)
    lat = lin(h2, w3_ref, b3_ref)                                   # (TB, 256) f32
    lat_ref[...] = lat                  # lane-dense store: [mu_pad(128) | logstd_pad(128)]

    # --- reparameterize: z = mu + eps * exp(logstd) (f32 math, vreg-aligned split) ---
    mu_p = lat[:, :L_P]
    logstd_p = lat[:, L_P:]
    z = (mu_p + eps * jnp.exp(logstd_p)).astype(jnp.bfloat16)       # (TB, 128)

    # --- decode ---
    h3 = jnp.tanh(lin(z, w4_ref, b4_ref)).astype(jnp.bfloat16)      # (TB, 256)
    h4 = jnp.tanh(lin(h3, w5_ref, b5_ref)).astype(jnp.bfloat16)     # (TB, 256)
    # sigmoid in f32 (v5e has no bf16 EUP), store bf16 -> decoded writeback halved
    dec_ref[...] = jax.nn.sigmoid(lin(h4, w6_ref, b6_ref)).astype(jnp.bfloat16)


# --- parameter construction ---------------------------------------------------
def init_params(key):
    """PyTorch nn.Linear-style init (U[-1/sqrt(fan_in), +]); weights stored (in, out)."""
    dims = [
        ("fc1", D_IN, H), ("fc2", H, H),
        ("fc31", H, L), ("fc32", H, L),
        ("fc4", L, H), ("fc5", H, H), ("fc6", H, D_IN),
    ]
    params = {}
    for name, fan_in, fan_out in dims:
        key, kw, kb = jax.random.split(key, 3)
        bound = 1.0 / (fan_in ** 0.5)
        params[name + "_w"] = jax.random.uniform(
            kw, (fan_in, fan_out), jnp.float32, -bound, bound)
        params[name + "_b"] = jax.random.uniform(
            kb, (1, fan_out), jnp.float32, -bound, bound)
    return params


def pack_params(params):
    """Pad to MXU-friendly shapes, fuse fc31||fc32, cast weights to bf16 (biases f32)."""
    def pad_w(w, rows, cols):
        return jnp.zeros((rows, cols), jnp.float32).at[:w.shape[0], :w.shape[1]].set(w)

    def pad_b(b, cols):
        return jnp.zeros((1, cols), jnp.float32).at[:, :b.shape[1]].set(b)

    packed = {}
    packed["fc1_w"] = pad_w(params["fc1_w"], D_IN, H_P).astype(jnp.bfloat16)   # (784, 256)
    packed["fc1_b"] = pad_b(params["fc1_b"], H_P)
    packed["fc2_w"] = pad_w(params["fc2_w"], H_P, H_P).astype(jnp.bfloat16)    # (256, 256)
    packed["fc2_b"] = pad_b(params["fc2_b"], H_P)

    # fused fc31 || fc32: mu -> cols [0, 50), logstd -> cols [128, 178), rest zero.
    w3 = jnp.zeros((H_P, LAT_W), jnp.float32)
    w3 = w3.at[:H, :L].set(params["fc31_w"])
    w3 = w3.at[:H, L_P:L_P + L].set(params["fc32_w"])
    b3 = jnp.zeros((1, LAT_W), jnp.float32)
    b3 = b3.at[:, :L].set(params["fc31_b"])
    b3 = b3.at[:, L_P:L_P + L].set(params["fc32_b"])
    packed["fc3_w"] = w3.astype(jnp.bfloat16)                                  # (256, 256)
    packed["fc3_b"] = b3

    packed["fc4_w"] = pad_w(params["fc4_w"], L_P, H_P).astype(jnp.bfloat16)    # (128, 256)
    packed["fc4_b"] = pad_b(params["fc4_b"], H_P)
    packed["fc5_w"] = pad_w(params["fc5_w"], H_P, H_P).astype(jnp.bfloat16)    # (256, 256)
    packed["fc5_b"] = pad_b(params["fc5_b"], H_P)
    packed["fc6_w"] = pad_w(params["fc6_w"], H_P, D_IN).astype(jnp.bfloat16)   # (256, 784)
    packed["fc6_b"] = pad_b(params["fc6_b"], D_IN)
    return packed


# --- wrapper ------------------------------------------------------------------
def omniglot1_forward(x, eps, packed, *, batch_tile=512):
    """x: (B, 784) f32; eps: (B, 50) f32 ->
       (decoded (B,784) bf16, mu (B,50) f32, logstd (B,50) f32)."""
    x = x.reshape(-1, D_IN)                       # mirrors x.view(-1, 784)
    B = x.shape[0]
    if B >= batch_tile:
        TB = batch_tile
    else:
        TB = max(8, ((B + 7) // 8) * 8)           # sublane multiple for tiny batches
    Bp = ((B + TB - 1) // TB) * TB

    if Bp != B:
        x = jnp.pad(x, ((0, Bp - B), (0, 0)))
    # eps padded to 128 lanes (tiny; fused under jit)
    eps_p = jnp.zeros((Bp, L_P), jnp.float32).at[:B, :L].set(eps)

    row_spec = lambda shape: pl.BlockSpec(shape, lambda i: (i, 0))
    const_spec = lambda shape: pl.BlockSpec(shape, lambda i: (0, 0))

    in_arrays = [x, eps_p]
    in_specs = [row_spec((TB, D_IN)), row_spec((TB, L_P))]
    for name in ("fc1", "fc2", "fc3", "fc4", "fc5", "fc6"):
        w = packed[name + "_w"]
        b = packed[name + "_b"]
        in_arrays += [w, b]
        in_specs += [const_spec(w.shape), const_spec(b.shape)]   # VMEM-resident weights

    out_shapes = (
        jax.ShapeDtypeStruct((Bp, D_IN), jnp.bfloat16),    # decoded, bf16 writeback
        jax.ShapeDtypeStruct((Bp, LAT_W), jnp.float32),    # fused [mu_pad | logstd_pad]
    )
    out_specs = (row_spec((TB, D_IN)), row_spec((TB, LAT_W)))

    flops = 2 * Bp * (D_IN * H_P + H_P * H_P + H_P * LAT_W
                      + L_P * H_P + H_P * H_P + H_P * D_IN)
    transcendentals = Bp * (4 * H_P + L_P + D_IN)
    bytes_accessed = sum(int(a.size) * a.dtype.itemsize for a in in_arrays)
    bytes_accessed += Bp * D_IN * 2 + Bp * LAT_W * 4

    dec_p, lat = pl.pallas_call(
        vae_forward_kernel,
        out_shape=out_shapes,
        grid_spec=pltpu.PrefetchScalarGridSpec(
            num_scalar_prefetch=0,
            grid=(Bp // TB,),
            in_specs=in_specs,
            out_specs=out_specs,
        ),
        compiler_params=pltpu.CompilerParams(
            dimension_semantics=("parallel",),
        ),
        cost_estimate=pl.CostEstimate(
            flops=flops, transcendentals=transcendentals, bytes_accessed=bytes_accessed),
    )(*in_arrays)

    decoded = dec_p[:B]                       # no column slice needed (stored at 784 wide)
    mu = lat[:B, :L]
    logstd = lat[:B, L_P:L_P + L]
    return decoded, mu, logstd


# --- pure-JAX reference (same bf16 quantization as the kernel) ------------------
def reference_forward(x, eps, packed):
    B = x.shape[0]
    x_bf = x.astype(jnp.bfloat16)
    eps_p = jnp.zeros((B, L_P), jnp.float32).at[:, :L].set(eps)

    def lin(h, name):
        return (jnp.dot(h, packed[name + "_w"], preferred_element_type=jnp.float32)
                + packed[name + "_b"])

    h1 = jnp.tanh(lin(x_bf, "fc1")).astype(jnp.bfloat16)
    h2 = jnp.tanh(lin(h1, "fc2")).astype(jnp.bfloat16)
    lat = lin(h2, "fc3")
    mu_p, ls_p = lat[:, :L_P], lat[:, L_P:]
    z = (mu_p + eps_p * jnp.exp(ls_p)).astype(jnp.bfloat16)
    h3 = jnp.tanh(lin(z, "fc4")).astype(jnp.bfloat16)
    h4 = jnp.tanh(lin(h3, "fc5")).astype(jnp.bfloat16)
    dec = jax.nn.sigmoid(lin(h4, "fc6")).astype(jnp.bfloat16)
    return dec, mu_p[:, :L], ls_p[:, :L]


if __name__ == "__main__":
    key = jax.random.PRNGKey(0)
    kp, kx, keps = jax.random.split(key, 3)

    params = init_params(kp)
    packed = pack_params(params)

    # Small deterministic example batch; forward does x.view(-1, 784).
    B = 16
    x = jax.random.uniform(kx, (B, 784), jnp.float32)
    eps = jax.random.normal(keps, (B, 50), jnp.float32)   # randn_like noise of reparameterize

    # Jit the whole wrapper so eps padding + pallas_call + output slicing fuse.
    fwd = jax.jit(lambda xx, ee: omniglot1_forward(xx, ee, packed))
    decoded, mu, logstd = fwd(x, eps)
    decoded = jax.block_until_ready(decoded)
    mu = jax.block_until_ready(mu)
    logstd = jax.block_until_ready(logstd)

    assert decoded.shape == (B, 784) and mu.shape == (B, 50) and logstd.shape == (B, 50)

    d_ref, mu_ref, ls_ref = reference_forward(x, eps, packed)
    assert jnp.allclose(decoded.astype(jnp.float32), d_ref.astype(jnp.float32),
                        atol=2e-2, rtol=2e-2)
    assert jnp.allclose(mu, mu_ref, atol=2e-2, rtol=2e-2)
    assert jnp.allclose(logstd, ls_ref, atol=2e-2, rtol=2e-2)

    # TODO(synk): compute_loss_for_batch (IWAE/VR-alpha loss with Multinomial sampling)
    # is training-loop logic, not part of the module's forward pass; not implemented here.
    print("KERNEL_OK")
</pallas_src>

<mosaic_0001>
module attributes {stable_mosaic.version = 11 : i64} {
  func.func @vae_forward_kernel(%arg0: i32, %arg1: memref<16x784xf32, #tpu.memory_space<vmem>>, %arg2: memref<16x128xf32, #tpu.memory_space<vmem>>, %arg3: memref<784x256xbf16, #tpu.memory_space<vmem>>, %arg4: memref<1x256xf32, #tpu.memory_space<vmem>>, %arg5: memref<256x256xbf16, #tpu.memory_space<vmem>>, %arg6: memref<1x256xf32, #tpu.memory_space<vmem>>, %arg7: memref<256x256xbf16, #tpu.memory_space<vmem>>, %arg8: memref<1x256xf32, #tpu.memory_space<vmem>>, %arg9: memref<128x256xbf16, #tpu.memory_space<vmem>>, %arg10: memref<1x256xf32, #tpu.memory_space<vmem>>, %arg11: memref<256x256xbf16, #tpu.memory_space<vmem>>, %arg12: memref<1x256xf32, #tpu.memory_space<vmem>>, %arg13: memref<256x784xbf16, #tpu.memory_space<vmem>>, %arg14: memref<1x784xf32, #tpu.memory_space<vmem>>, %arg15: memref<16x784xbf16, #tpu.memory_space<vmem>>, %arg16: memref<16x256xf32, #tpu.memory_space<vmem>>) attributes {dimension_semantics = [#tpu.dimension_semantics<parallel>], iteration_bounds = array<i64: 1>, scalar_prefetch = 0 : i64, scratch_operands = 0 : i64, tpu.core_type = #tpu.core_type<tc>, window_params = [{transform_indices = @transform_0, window_bounds = array<i64: 16, 784>}, {transform_indices = @transform_1, window_bounds = array<i64: 16, 128>}, {pipeline_mode = #tpu.pipeline_mode<synchronous>, transform_indices = @transform_2, window_bounds = array<i64: 784, 256>}, {pipeline_mode = #tpu.pipeline_mode<synchronous>, transform_indices = @transform_3, window_bounds = array<i64: 1, 256>}, {pipeline_mode = #tpu.pipeline_mode<synchronous>, transform_indices = @transform_4, window_bounds = array<i64: 256, 256>}, {pipeline_mode = #tpu.pipeline_mode<synchronous>, transform_indices = @transform_5, window_bounds = array<i64: 1, 256>}, {pipeline_mode = #tpu.pipeline_mode<synchronous>, transform_indices = @transform_6, window_bounds = array<i64: 256, 256>}, {pipeline_mode = #tpu.pipeline_mode<synchronous>, transform_indices = @transform_7, window_bounds = array<i64: 1, 256>}, {pipeline_mode = #tpu.pipeline_mode<synchronous>, transform_indices = @transform_8, window_bounds = array<i64: 128, 256>}, {pipeline_mode = #tpu.pipeline_mode<synchronous>, transform_indices = @transform_9, window_bounds = array<i64: 1, 256>}, {pipeline_mode = #tpu.pipeline_mode<synchronous>, transform_indices = @transform_10, window_bounds = array<i64: 256, 256>}, {pipeline_mode = #tpu.pipeline_mode<synchronous>, transform_indices = @transform_11, window_bounds = array<i64: 1, 256>}, {pipeline_mode = #tpu.pipeline_mode<synchronous>, transform_indices = @transform_12, window_bounds = array<i64: 256, 784>}, {pipeline_mode = #tpu.pipeline_mode<synchronous>, transform_indices = @transform_13, window_bounds = array<i64: 1, 784>}, {transform_indices = @transform_14, window_bounds = array<i64: 16, 784>}, {transform_indices = @transform_15, window_bounds = array<i64: 16, 256>}]} {
    %c0 = arith.constant 0 : index
    %c0_0 = arith.constant 0 : index
    %0 = vector.load %arg1[%c0, %c0_0] : memref<16x784xf32, #tpu.memory_space<vmem>>, vector<16x784xf32>
    %1 = arith.truncf %0 : vector<16x784xf32> to vector<16x784xbf16>
    %c0_1 = arith.constant 0 : index
    %c0_2 = arith.constant 0 : index
    %2 = vector.load %arg2[%c0_1, %c0_2] : memref<16x128xf32, #tpu.memory_space<vmem>>, vector<16x128xf32>
    %c0_3 = arith.constant 0 : index
    %c0_4 = arith.constant 0 : index
    %3 = vector.load %arg3[%c0_3, %c0_4] : memref<784x256xbf16, #tpu.memory_space<vmem>>, vector<784x256xbf16>
    %cst = arith.constant dense<0.000000e+00> : vector<16x256xf32>
    %4 = tpu.matmul %1, %3, %cst {dimension_numbers = #tpu.dot_dimension_numbers<[1], [0], [0], [1], [0, 0, 1, 1], [], []>} : vector<16x784xbf16>, vector<784x256xbf16>, vector<16x256xf32> -> vector<16x256xf32>
    %c0_5 = arith.constant 0 : index
    %c0_6 = arith.constant 0 : index
    %5 = vector.load %arg4[%c0_5, %c0_6] : memref<1x256xf32, #tpu.memory_space<vmem>>, vector<1x256xf32>
    %6 = vector.broadcast %5 : vector<1x256xf32> to vector<16x256xf32>
    %7 = arith.addf %4, %6 : vector<16x256xf32>
    %8 = math.tanh %7 : vector<16x256xf32>
    %9 = arith.truncf %8 : vector<16x256xf32> to vector<16x256xbf16>
    %c0_7 = arith.constant 0 : index
    %c0_8 = arith.constant 0 : index
    %10 = vector.load %arg5[%c0_7, %c0_8] : memref<256x256xbf16, #tpu.memory_space<vmem>>, vector<256x256xbf16>
    %cst_9 = arith.constant dense<0.000000e+00> : vector<16x256xf32>
    %11 = tpu.matmul %9, %10, %cst_9 {dimension_numbers = #tpu.dot_dimension_numbers<[1], [0], [0], [1], [0, 0, 1, 1], [], []>} : vector<16x256xbf16>, vector<256x256xbf16>, vector<16x256xf32> -> vector<16x256xf32>
    %c0_10 = arith.constant 0 : index
    %c0_11 = arith.constant 0 : index
    %12 = vector.load %arg6[%c0_10, %c0_11] : memref<1x256xf32, #tpu.memory_space<vmem>>, vector<1x256xf32>
    %13 = vector.broadcast %12 : vector<1x256xf32> to vector<16x256xf32>
    %14 = arith.addf %11, %13 : vector<16x256xf32>
    %15 = math.tanh %14 : vector<16x256xf32>
    %16 = arith.truncf %15 : vector<16x256xf32> to vector<16x256xbf16>
    %c0_12 = arith.constant 0 : index
    %c0_13 = arith.constant 0 : index
    %17 = vector.load %arg7[%c0_12, %c0_13] : memref<256x256xbf16, #tpu.memory_space<vmem>>, vector<256x256xbf16>
    %cst_14 = arith.constant dense<0.000000e+00> : vector<16x256xf32>
    %18 = tpu.matmul %16, %17, %cst_14 {dimension_numbers = #tpu.dot_dimension_numbers<[1], [0], [0], [1], [0, 0, 1, 1], [], []>} : vector<16x256xbf16>, vector<256x256xbf16>, vector<16x256xf32> -> vector<16x256xf32>
    %c0_15 = arith.constant 0 : index
    %c0_16 = arith.constant 0 : index
    %19 = vector.load %arg8[%c0_15, %c0_16] : memref<1x256xf32, #tpu.memory_space<vmem>>, vector<1x256xf32>
    %20 = vector.broadcast %19 : vector<1x256xf32> to vector<16x256xf32>
    %21 = arith.addf %18, %20 : vector<16x256xf32>
    %c0_17 = arith.constant 0 : index
    %c0_18 = arith.constant 0 : index
    %22 = vector.load %arg16[%c0_17, %c0_18] : memref<16x256xf32, #tpu.memory_space<vmem>>, vector<16x256xf32>
    tpu.vector_store %arg16[%c0_17, %c0_18], %21 {strides = array<i32>} : memref<16x256xf32, #tpu.memory_space<vmem>>, vector<16x256xf32>,
    %23 = vector.extract_strided_slice %21 {offsets = [0, 0], sizes = [16, 128], strides = [1, 1]} : vector<16x256xf32> to vector<16x128xf32>
    %24 = vector.extract_strided_slice %21 {offsets = [0, 128], sizes = [16, 128], strides = [1, 1]} : vector<16x256xf32> to vector<16x128xf32>
    %25 = math.exp %24 : vector<16x128xf32>
    %26 = arith.mulf %2, %25 : vector<16x128xf32>
    %27 = arith.addf %23, %26 : vector<16x128xf32>
    %28 = arith.truncf %27 : vector<16x128xf32> to vector<16x128xbf16>
    %c0_19 = arith.constant 0 : index
    %c0_20 = arith.constant 0 : index
    %29 = vector.load %arg9[%c0_19, %c0_20] : memref<128x256xbf16, #tpu.memory_space<vmem>>, vector<128x256xbf16>
    %cst_21 = arith.constant dense<0.000000e+00> : vector<16x256xf32>
    %30 = tpu.matmul %28, %29, %cst_21 {dimension_numbers = #tpu.dot_dimension_numbers<[1], [0], [0], [1], [0, 0, 1, 1], [], []>} : vector<16x128xbf16>, vector<128x256xbf16>, vector<16x256xf32> -> vector<16x256xf32>
    %c0_22 = arith.constant 0 : index
    %c0_23 = arith.constant 0 : index
    %31 = vector.load %arg10[%c0_22, %c0_23] : memref<1x256xf32, #tpu.memory_space<vmem>>, vector<1x256xf32>
    %32 = vector.broadcast %31 : vector<1x256xf32> to vector<16x256xf32>
    %33 = arith.addf %30, %32 : vector<16x256xf32>
    %34 = math.tanh %33 : vector<16x256xf32>
    %35 = arith.truncf %34 : vector<16x256xf32> to vector<16x256xbf16>
    %c0_24 = arith.constant 0 : index
    %c0_25 = arith.constant 0 : index
    %36 = vector.load %arg11[%c0_24, %c0_25] : memref<256x256xbf16, #tpu.memory_space<vmem>>, vector<256x256xbf16>
    %cst_26 = arith.constant dense<0.000000e+00> : vector<16x256xf32>
    %37 = tpu.matmul %35, %36, %cst_26 {dimension_numbers = #tpu.dot_dimension_numbers<[1], [0], [0], [1], [0, 0, 1, 1], [], []>} : vector<16x256xbf16>, vector<256x256xbf16>, vector<16x256xf32> -> vector<16x256xf32>
    %c0_27 = arith.constant 0 : index
    %c0_28 = arith.constant 0 : index
    %38 = vector.load %arg12[%c0_27, %c0_28] : memref<1x256xf32, #tpu.memory_space<vmem>>, vector<1x256xf32>
    %39 = vector.broadcast %38 : vector<1x256xf32> to vector<16x256xf32>
    %40 = arith.addf %37, %39 : vector<16x256xf32>
    %41 = math.tanh %40 : vector<16x256xf32>
    %42 = arith.truncf %41 : vector<16x256xf32> to vector<16x256xbf16>
    %c0_29 = arith.constant 0 : index
    %c0_30 = arith.constant 0 : index
    %43 = vector.load %arg13[%c0_29, %c0_30] : memref<256x784xbf16, #tpu.memory_space<vmem>>, vector<256x784xbf16>
    %cst_31 = arith.constant dense<0.000000e+00> : vector<16x784xf32>
    %44 = tpu.matmul %42, %43, %cst_31 {dimension_numbers = #tpu.dot_dimension_numbers<[1], [0], [0], [1], [0, 0, 1, 1], [], []>} : vector<16x256xbf16>, vector<256x784xbf16>, vector<16x784xf32> -> vector<16x784xf32>
    %c0_32 = arith.constant 0 : index
    %c0_33 = arith.constant 0 : index
    %45 = vector.load %arg14[%c0_32, %c0_33] : memref<1x784xf32, #tpu.memory_space<vmem>>, vector<1x784xf32>
    %46 = vector.broadcast %45 : vector<1x784xf32> to vector<16x784xf32>
    %47 = arith.addf %44, %46 : vector<16x784xf32>
    %48 = arith.negf %47 : vector<16x784xf32>
    %49 = math.exp %48 : vector<16x784xf32>
    %cst_34 = arith.constant 1.000000e+00 : f32
    %50 = vector.broadcast %cst_34 : f32 to vector<16x784xf32>
    %51 = arith.addf %50, %49 : vector<16x784xf32>
    %52 = arith.divf %50, %51 : vector<16x784xf32>
    %53 = arith.truncf %52 : vector<16x784xf32> to vector<16x784xbf16>
    %c0_35 = arith.constant 0 : index
    %c0_36 = arith.constant 0 : index
    %54 = vector.load %arg15[%c0_35, %c0_36] : memref<16x784xbf16, #tpu.memory_space<vmem>>, vector<16x784xbf16>
    tpu.vector_store %arg15[%c0_35, %c0_36], %53 {strides = array<i32>} : memref<16x784xbf16, #tpu.memory_space<vmem>>, vector<16x784xbf16>,
    return
  }
  func.func @transform_0(%arg0: i32) -> (i32, i32) {
    %c0_i32 = arith.constant 0 : i32
    %c0_i32_0 = arith.constant 0 : i32
    return %arg0, %c0_i32 : i32, i32
  }
  func.func @transform_1(%arg0: i32) -> (i32, i32) {
    %c0_i32 = arith.constant 0 : i32
    %c0_i32_0 = arith.constant 0 : i32
    return %arg0, %c0_i32 : i32, i32
  }
  func.func @transform_2(%arg0: i32) -> (i32, i32) {
    %c0_i32 = arith.constant 0 : i32
    %c0_i32_0 = arith.constant 0 : i32
    %c0_i32_1 = arith.constant 0 : i32
    return %c0_i32, %c0_i32_0 : i32, i32
  }
  func.func @transform_3(%arg0: i32) -> (i32, i32) {
    %c0_i32 = arith.constant 0 : i32
    %c0_i32_0 = arith.constant 0 : i32
    %c0_i32_1 = arith.constant 0 : i32
    return %c0_i32, %c0_i32_0 : i32, i32
  }
  func.func @transform_4(%arg0: i32) -> (i32, i32) {
    %c0_i32 = arith.constant 0 : i32
    %c0_i32_0 = arith.constant 0 : i32
    %c0_i32_1 = arith.constant 0 : i32
    return %c0_i32, %c0_i32_0 : i32, i32
  }
  func.func @transform_5(%arg0: i32) -> (i32, i32) {
    %c0_i32 = arith.constant 0 : i32
    %c0_i32_0 = arith.constant 0 : i32
    %c0_i32_1 = arith.constant 0 : i32
    return %c0_i32, %c0_i32_0 : i32, i32
  }
  func.func @transform_6(%arg0: i32) -> (i32, i32) {
    %c0_i32 = arith.constant 0 : i32
    %c0_i32_0 = arith.constant 0 : i32
    %c0_i32_1 = arith.constant 0 : i32
    return %c0_i32, %c0_i32_0 : i32, i32
  }
  func.func @transform_7(%arg0: i32) -> (i32, i32) {
    %c0_i32 = arith.constant 0 : i32
    %c0_i32_0 = arith.constant 0 : i32
    %c0_i32_1 = arith.constant 0 : i32
    return %c0_i32, %c0_i32_0 : i32, i32
  }
  func.func @transform_8(%arg0: i32) -> (i32, i32) {
    %c0_i32 = arith.constant 0 : i32
    %c0_i32_0 = arith.constant 0 : i32
    %c0_i32_1 = arith.constant 0 : i32
    return %c0_i32, %c0_i32_0 : i32, i32
  }
  func.func @transform_9(%arg0: i32) -> (i32, i32) {
    %c0_i32 = arith.constant 0 : i32
    %c0_i32_0 = arith.constant 0 : i32
    %c0_i32_1 = arith.constant 0 : i32
    return %c0_i32, %c0_i32_0 : i32, i32
  }
  func.func @transform_10(%arg0: i32) -> (i32, i32) {
    %c0_i32 = arith.constant 0 : i32
    %c0_i32_0 = arith.constant 0 : i32
    %c0_i32_1 = arith.constant 0 : i32
    return %c0_i32, %c0_i32_0 : i32, i32
  }
  func.func @transform_11(%arg0: i32) -> (i32, i32) {
    %c0_i32 = arith.constant 0 : i32
    %c0_i32_0 = arith.constant 0 : i32
    %c0_i32_1 = arith.constant 0 : i32
    return %c0_i32, %c0_i32_0 : i32, i32
  }
  func.func @transform_12(%arg0: i32) -> (i32, i32) {
    %c0_i32 = arith.constant 0 : i32
    %c0_i32_0 = arith.constant 0 : i32
    %c0_i32_1 = arith.constant 0 : i32
    return %c0_i32, %c0_i32_0 : i32, i32
  }
  func.func @transform_13(%arg0: i32) -> (i32, i32) {
    %c0_i32 = arith.constant 0 : i32
    %c0_i32_0 = arith.constant 0 : i32
    %c0_i32_1 = arith.constant 0 : i32
    return %c0_i32, %c0_i32_0 : i32, i32
  }
  func.func @transform_14(%arg0: i32) -> (i32, i32) {
    %c0_i32 = arith.constant 0 : i32
    %c0_i32_0 = arith.constant 0 : i32
    return %arg0, %c0_i32 : i32, i32
  }
  func.func @transform_15(%arg0: i32) -> (i32, i32) {
    %c0_i32 = arith.constant 0 : i32
    %c0_i32_0 = arith.constant 0 : i32
    return %arg0, %c0_i32 : i32, i32
  }
}

</mosaic_0001>

<llo_original>
// kernel: _lambda_.1
$region0: #{_lambda_.1}
  #allocation0 [shape = 'u32[]', space=smem, size = 0x4, offset = 0x4, fixed_abs, tag = 'smem constant byte address 0x4 - core index']
  #allocation1 [shape = 'u32[72,128]{1,0:T(1,128)}', space=vmem, size = 0x9000, scoped, tag = 'internal scratch']
  %s0 = inlined_call_operand.hbm [shape: f32[16,784], index: 0, kind: input, shape index: {}]
  %s1 = inlined_call_operand.vmem [shape: f32[16,128], index: 1, kind: input, shape index: {}]
  %s2 = inlined_call_operand.hbm [shape: bf16[784,256], index: 2, kind: input, shape index: {}]
  %s3 = inlined_call_operand.vmem [shape: f32[1,256], index: 3, kind: input, shape index: {}]
  %s4 = inlined_call_operand.hbm [shape: bf16[256,256], index: 4, kind: input, shape index: {}]
  %s5 = inlined_call_operand.vmem [shape: f32[1,256], index: 5, kind: input, shape index: {}]
  %s6 = inlined_call_operand.hbm [shape: bf16[256,256], index: 6, kind: input, shape index: {}]
  %s7 = inlined_call_operand.vmem [shape: f32[1,256], index: 7, kind: input, shape index: {}]
  %s8 = inlined_call_operand.hbm [shape: bf16[128,256], index: 8, kind: input, shape index: {}]
  %s9 = inlined_call_operand.vmem [shape: f32[1,256], index: 9, kind: input, shape index: {}]
  %s10 = inlined_call_operand.hbm [shape: bf16[256,256], index: 10, kind: input, shape index: {}]
  %s11 = inlined_call_operand.vmem [shape: f32[1,256], index: 11, kind: input, shape index: {}]
  %s12 = inlined_call_operand.hbm [shape: bf16[256,784], index: 12, kind: input, shape index: {}]
  %s13 = inlined_call_operand.vmem [shape: f32[1,784], index: 13, kind: input, shape index: {}]
  %s14 = inlined_call_operand.hbm [shape: bf16[16,784], index: 14, kind: output, shape index: {0}]
  %s15 = inlined_call_operand.vmem [shape: f32[16,256], index: 15, kind: output, shape index: {1}]
  %16 = xla_tuple %s14, %s15
  %s17 = sld [smem:[#allocation0]]
  $region102: #{_lambda_.1} parent=0
    _
  %s19 = ssub.s32 1, %s17
  %s20 = scalar_select 0, %s19, %s17
  $region1: #{_lambda_.1} parent=0
    #allocation2 [shape = 'u8[57344]{0}', space=vmem, size = 0xe000, scoped, tag = 'input window, operand 0, single buffered']
    #allocation3 [shape = 's32[1]{0}', space=sflag, size = 0x4, scoped, tag = 'scoped memory for _lambda_.1']
    #allocation4 [shape = 's32[1]{0}', space=sflag, size = 0x4, scoped, tag = 'scoped memory for _lambda_.1']
    #allocation5 [shape = 'u8[401408]{0}', space=vmem, size = 0x62000, scoped, tag = 'input window, operand 2, single buffered']
    #allocation6 [shape = 's32[1]{0}', space=sflag, size = 0x4, scoped, tag = 'scoped memory for _lambda_.1']
    #allocation7 [shape = 'u8[131072]{0}', space=vmem, size = 0x20000, scoped, tag = 'input window, operand 4, single buffered']
    #allocation8 [shape = 'u8[131072]{0}', space=vmem, size = 0x20000, scoped, tag = 'input window, operand 6, single buffered']
    #allocation9 [shape = 's32[1]{0}', space=sflag, size = 0x4, scoped, tag = 'scoped memory for _lambda_.1']
    #allocation10 [shape = 'u8[65536]{0}', space=vmem, size = 0x10000, scoped, tag = 'input window, operand 8, single buffered']
    #allocation11 [shape = 'u8[131072]{0}', space=vmem, size = 0x20000, scoped, tag = 'input window, operand 10, single buffered']
    #allocation12 [shape = 's32[1]{0}', space=sflag, size = 0x4, scoped, tag = 'scoped memory for _lambda_.1']
    #allocation13 [shape = 'u8[458752]{0}', space=vmem, size = 0x70000, scoped, tag = 'input window, operand 12, single buffered']
    #allocation14 [shape = 'u8[28672]{0}', space=vmem, size = 0x7000, scoped, tag = 'output window, operand 0, single buffered']
    %21 = vsyncpa [#allocation3], 0
    %22 = vsyncpa [#allocation6], 0
    %23 = vsyncpa [#allocation9], 0
    %24 = vsyncpa [#allocation12], 0
    %25 = vsyncpa [#allocation4], 0
    // Predicated region
    $region2: #{_lambda_.1} parent=1 // pred_check
      _
    $region3: #{_lambda_.1} parent=1 // pred_check_branch
      %27 = sbr.rel (0) target = $region5
    $region4: #{_lambda_.1} parent=1 // pred_region
      %29 = vsyncadd [#allocation3], 0
      %s30 = sshll.u32 %s0, 4
      %s31 = int_to_ptr.hbm [resolvable:$true] %s30
      %s32 = sshll.u32 [#allocation2], 4
      %s33 = int_to_ptr.vmem [resolvable:$true] %s32
      %38 = dma.hbm_to_vmem [thread:$0]  %s31, 1792, %s33, [#allocation3], 896, 896, 56
    $region5: #{_lambda_.1} parent=1 // pred_fallthru
      _
    // Predicated region
    $region6: #{_lambda_.1} parent=1 // pred_check
      _
    $region7: #{_lambda_.1} parent=1 // pred_check_branch
      %40 = sbr.rel (0) target = $region9
    $region8: #{_lambda_.1} parent=1 // pred_region
      _
    $region9: #{_lambda_.1} parent=1 // pred_fallthru
      _
    // Predicated region
    $region10: #{_lambda_.1} parent=1 // pred_check
      _
    $region11: #{_lambda_.1} parent=1 // pred_check_branch
      %42 = sbr.rel (0) target = $region13
    $region12: #{_lambda_.1} parent=1 // pred_region
      %44 = vsyncadd [#allocation6], 0
      %s45 = sshll.u32 %s2, 4
      %s46 = int_to_ptr.hbm [resolvable:$true] %s45
      %s47 = sshll.u32 [#allocation5], 4
      %s48 = int_to_ptr.vmem [resolvable:$true] %s47
      %53 = dma.hbm_to_vmem [thread:$0]  %s46, 12544, %s48, [#allocation6], 128, 128, 8
    $region13: #{_lambda_.1} parent=1 // pred_fallthru
      _
    // Predicated region
    $region14: #{_lambda_.1} parent=1 // pred_check
      _
    $region15: #{_lambda_.1} parent=1 // pred_check_branch
      %55 = sbr.rel (0) target = $region17
    $region16: #{_lambda_.1} parent=1 // pred_region
      _
    $region17: #{_lambda_.1} parent=1 // pred_fallthru
      _
    // Predicated region
    $region18: #{_lambda_.1} parent=1 // pred_check
      _
    $region19: #{_lambda_.1} parent=1 // pred_check_branch
      %57 = sbr.rel (0) target = $region21
    $region20: #{_lambda_.1} parent=1 // pred_region
      %59 = vsyncadd [#allocation6], 0
      %s60 = sshll.u32 %s4, 4
      %s61 = int_to_ptr.hbm [resolvable:$true] %s60
      %s62 = sshll.u32 [#allocation7], 4
      %s63 = int_to_ptr.vmem [resolvable:$true] %s62
      %68 = dma.hbm_to_vmem [thread:$0]  %s61, 4096, %s63, [#allocation6], 128, 128, 8
    $region21: #{_lambda_.1} parent=1 // pred_fallthru
      _
    // Predicated region
    $region22: #{_lambda_.1} parent=1 // pred_check
      _
    $region23: #{_lambda_.1} parent=1 // pred_check_branch
      %70 = sbr.rel (0) target = $region25
    $region24: #{_lambda_.1} parent=1 // pred_region
      _
    $region25: #{_lambda_.1} parent=1 // pred_fallthru
      _
    // Predicated region
    $region26: #{_lambda_.1} parent=1 // pred_check
      _
    $region27: #{_lambda_.1} parent=1 // pred_check_branch
      %72 = sbr.rel (0) target = $region29
    $region28: #{_lambda_.1} parent=1 // pred_region
      %74 = vsyncadd [#allocation9], 0
      %s75 = sshll.u32 %s6, 4
      %s76 = int_to_ptr.hbm [resolvable:$true] %s75
      %s77 = sshll.u32 [#allocation8], 4
      %s78 = int_to_ptr.vmem [resolvable:$true] %s77
      %83 = dma.hbm_to_vmem [thread:$0]  %s76, 4096, %s78, [#allocation9], 128, 128, 8
    $region29: #{_lambda_.1} parent=1 // pred_fallthru
      _
    // Predicated region
    $region30: #{_lambda_.1} parent=1 // pred_check
      _
    $region31: #{_lambda_.1} parent=1 // pred_check_branch
      %85 = sbr.rel (0) target = $region33
    $region32: #{_lambda_.1} parent=1 // pred_region
      _
    $region33: #{_lambda_.1} parent=1 // pred_fallthru
      _
    // Predicated region
    $region34: #{_lambda_.1} parent=1 // pred_check
      _
    $region35: #{_lambda_.1} parent=1 // pred_check_branch
      %87 = sbr.rel (0) target = $region37
    $region36: #{_lambda_.1} parent=1 // pred_region
      %89 = vsyncadd [#allocation9], 0
      %s90 = sshll.u32 %s8, 4
      %s91 = int_to_ptr.hbm [resolvable:$true] %s90
      %s92 = sshll.u32 [#allocation10], 4
      %s93 = int_to_ptr.vmem [resolvable:$true] %s92
      %98 = dma.hbm_to_vmem [thread:$0]  %s91, 2048, %s93, [#allocation9], 128, 128, 8
    $region37: #{_lambda_.1} parent=1 // pred_fallthru
      _
    // Predicated region
    $region38: #{_lambda_.1} parent=1 // pred_check
      _
    $region39: #{_lambda_.1} parent=1 // pred_check_branch
      %100 = sbr.rel (0) target = $region41
    $region40: #{_lambda_.1} parent=1 // pred_region
      _
    $region41: #{_lambda_.1} parent=1 // pred_fallthru
      _
    // Predicated region
    $region42: #{_lambda_.1} parent=1 // pred_check
      _
    $region43: #{_lambda_.1} parent=1 // pred_check_branch
      %102 = sbr.rel (0) target = $region45
    $region44: #{_lambda_.1} parent=1 // pred_region
      %104 = vsyncadd [#allocation12], 0
      %s105 = sshll.u32 %s10, 4
      %s106 = int_to_ptr.hbm [resolvable:$true] %s105
      %s107 = sshll.u32 [#allocation11], 4
      %s108 = int_to_ptr.vmem [resolvable:$true] %s107
      %113 = dma.hbm_to_vmem [thread:$0]  %s106, 4096, %s108, [#allocation12], 128, 128, 8
    $region45: #{_lambda_.1} parent=1 // pred_fallthru
      _
    // Predicated region
    $region46: #{_lambda_.1} parent=1 // pred_check
      _
    $region47: #{_lambda_.1} parent=1 // pred_check_branch
      %115 = sbr.rel (0) target = $region49
    $region48: #{_lambda_.1} parent=1 // pred_region
      _
    $region49: #{_lambda_.1} parent=1 // pred_fallthru
      _
    // Predicated region
    $region50: #{_lambda_.1} parent=1 // pred_check
      _
    $region51: #{_lambda_.1} parent=1 // pred_check_branch
      %117 = sbr.rel (0) target = $region53
    $region52: #{_lambda_.1} parent=1 // pred_region
      %119 = vsyncadd [#allocation12], 0
      %s120 = sshll.u32 %s12, 4
      %s121 = int_to_ptr.hbm [resolvable:$true] %s120
      %s122 = sshll.u32 [#allocation13], 4
      %s123 = int_to_ptr.vmem [resolvable:$true] %s122
      %128 = dma.hbm_to_vmem [thread:$0]  %s121, 14336, %s123, [#allocation12], 448, 448, 28
    $region53: #{_lambda_.1} parent=1 // pred_fallthru
      _
    // Predicated region
    $region54: #{_lambda_.1} parent=1 // pred_check
      _
    $region55: #{_lambda_.1} parent=1 // pred_check_branch
      %130 = sbr.rel (0) target = $region57
    $region56: #{_lambda_.1} parent=1 // pred_region
      _
    $region57: #{_lambda_.1} parent=1 // pred_fallthru
      _
    // Predicated region
    $region58: #{_lambda_.1} parent=1 // pred_check
      _
    $region59: #{_lambda_.1} parent=1 // pred_check_branch
      %132 = sbr.rel (0) target = $region61
    $region60: #{_lambda_.1} parent=1 // pred_region
      %134 = dma.done [#allocation3], 1792
    $region61: #{_lambda_.1} parent=1 // pred_fallthru
      _
    // Predicated region
    $region62: #{_lambda_.1} parent=1 // pred_check
      _
    $region63: #{_lambda_.1} parent=1 // pred_check_branch
      %136 = sbr.rel (0) target = $region65
    $region64: #{_lambda_.1} parent=1 // pred_region
      %138 = dma.done [#allocation6], 12544
    $region65: #{_lambda_.1} parent=1 // pred_fallthru
      _
    // Predicated region
    $region66: #{_lambda_.1} parent=1 // pred_check
      _
    $region67: #{_lambda_.1} parent=1 // pred_check_branch
      %140 = sbr.rel (0) target = $region69
    $region68: #{_lambda_.1} parent=1 // pred_region
      %142 = dma.done [#allocation6], 4096
    $region69: #{_lambda_.1} parent=1 // pred_fallthru
      _
    // Predicated region
    $region70: #{_lambda_.1} parent=1 // pred_check
      _
    $region71: #{_lambda_.1} parent=1 // pred_check_branch
      %144 = sbr.rel (0) target = $region73
    $region72: #{_lambda_.1} parent=1 // pred_region
      %146 = dma.done [#allocation9], 4096
    $region73: #{_lambda_.1} parent=1 // pred_fallthru
      _
    // Predicated region
    $region74: #{_lambda_.1} parent=1 // pred_check
      _
    $region75: #{_lambda_.1} parent=1 // pred_check_branch
      %148 = sbr.rel (0) target = $region77
    $region76: #{_lambda_.1} parent=1 // pred_region
      %150 = dma.done [#allocation9], 2048
    $region77: #{_lambda_.1} parent=1 // pred_fallthru
      _
    // Predicated region
    $region78: #{_lambda_.1} parent=1 // pred_check
      _
    $region79: #{_lambda_.1} parent=1 // pred_check_branch
      %152 = sbr.rel (0) target = $region81
    $region80: #{_lambda_.1} parent=1 // pred_region
      %154 = dma.done [#allocation12], 4096
    $region81: #{_lambda_.1} parent=1 // pred_fallthru
      _
    // Predicated region
    $region82: #{_lambda_.1} parent=1 // pred_check
      _
    $region83: #{_lambda_.1} parent=1 // pred_check_branch
      %156 = sbr.rel (0) target = $region85
    $region84: #{_lambda_.1} parent=1 // pred_region
      %158 = dma.done [#allocation12], 14336
    $region85: #{_lambda_.1} parent=1 // pred_fallthru
      _
    %v160 = vld [vmem:[#allocation2] sm:$0xff]
    %v161 = vld [vmem:[#allocation2 + $0x8] sm:$0xff]
    %v162 = vld [vmem:[#allocation2 + $0x10] sm:$0xff]
    %v163 = vld [vmem:[#allocation2 + $0x18] sm:$0xff]
    %v164 = vld [vmem:[#allocation2 + $0x20] sm:$0xff]
    %v165 = vld [vmem:[#allocation2 + $0x28] sm:$0xff]
    %v166 = vld [vmem:[#allocation2 + $0x30] sm:$0xff]
    %v167 = vld [vmem:[#allocation2 + $0x38] sm:$0xff]
    %v168 = vld [vmem:[#allocation2 + $0x40] sm:$0xff]
    %v169 = vld [vmem:[#allocation2 + $0x48] sm:$0xff]
    %v170 = vld [vmem:[#allocation2 + $0x50] sm:$0xff]
    %v171 = vld [vmem:[#allocation2 + $0x58] sm:$0xff]
    %v172 = vld [vmem:[#allocation2 + $0x60] sm:$0xff]
    %v173 = vld [vmem:[#allocation2 + $0x68] sm:$0xff]
    %v174 = vpack.c.bf16 %v167, %v160
    %v175 = vpack.c.bf16 %v168, %v161
    %v176 = vpack.c.bf16 %v169, %v162
    %v177 = vpack.c.bf16 %v170, %v163
    %v178 = vpack.c.bf16 %v171, %v164
    %v179 = vpack.c.bf16 %v172, %v165
    %v180 = vpack.c.bf16 %v173, %v166
    %v181 = vld [vmem:[%s1] sm:$0xff]
    %v182 = vld [vmem:[%s1 + $0x8] sm:$0xff]
    %v183 = vld [vmem:[#allocation5] sm:$0xff]
    %v184 = vld [vmem:[#allocation5 + $0x8] sm:$0xff]
    %v185 = vld [vmem:[#allocation5 + $0x10] sm:$0xff]
    %v186 = vld [vmem:[#allocation5 + $0x18] sm:$0xff]
    %v187 = vld [vmem:[#allocation5 + $0x20] sm:$0xff]
    %v188 = vld [vmem:[#allocation5 + $0x28] sm:$0xff]
    %v189 = vld [vmem:[#allocation5 + $0x30] sm:$0xff]
    %v190 = vld [vmem:[#allocation5 + $0x38] sm:$0xff]
    %v191 = vld [vmem:[#allocation5 + $0x40] sm:$0xff]
    %v192 = vld [vmem:[#allocation5 + $0x48] sm:$0xff]
    %v193 = vld [vmem:[#allocation5 + $0x50] sm:$0xff]
    %v194 = vld [vmem:[#allocation5 + $0x58] sm:$0xff]
    %v195 = vld [vmem:[#allocation5 + $0x60] sm:$0xff]
    %v196 = vld [vmem:[#allocation5 + $0x68] sm:$0xff]
    %v197 = vld [vmem:[#allocation5 + $0x70] sm:$0xff]
    %v198 = vld [vmem:[#allocation5 + $0x78] sm:$0xff]
    %v199 = vld [vmem:[#allocation5 + $0x80] sm:$0xff]
    %v200 = vld [vmem:[#allocation5 + $0x88] sm:$0xff]
    %v201 = vld [vmem:[#allocation5 + $0x90] sm:$0xff]
    %v202 = vld [vmem:[#allocation5 + $0x98] sm:$0xff]
    %v203 = vld [vmem:[#allocation5 + $0xa0] sm:$0xff]
    %v204 = vld [vmem:[#allocation5 + $0xa8] sm:$0xff]
    %v205 = vld [vmem:[#allocation5 + $0xb0] sm:$0xff]
    %v206 = vld [vmem:[#allocation5 + $0xb8] sm:$0xff]
    %v207 = vld [vmem:[#allocation5 + $0xc0] sm:$0xff]
    %v208 = vld [vmem:[#allocation5 + $0xc8] sm:$0xff]
    %v209 = vld [vmem:[#allocation5 + $0xd0] sm:$0xff]
    %v210 = vld [vmem:[#allocation5 + $0xd8] sm:$0xff]
    %v211 = vld [vmem:[#allocation5 + $0xe0] sm:$0xff]
    %v212 = vld [vmem:[#allocation5 + $0xe8] sm:$0xff]
    %v213 = vld [vmem:[#allocation5 + $0xf0] sm:$0xff]
    %v214 = vld [vmem:[#allocation5 + $0xf8] sm:$0xff]
    %v215 = vld [vmem:[#allocation5 + $0x100] sm:$0xff]
    %v216 = vld [vmem:[#allocation5 + $0x108] sm:$0xff]
    %v217 = vld [vmem:[#allocation5 + $0x110] sm:$0xff]
    %v218 = vld [vmem:[#allocation5 + $0x118] sm:$0xff]
    %v219 = vld [vmem:[#allocation5 + $0x120] sm:$0xff]
    %v220 = vld [vmem:[#allocation5 + $0x128] sm:$0xff]
    %v221 = vld [vmem:[#allocation5 + $0x130] sm:$0xff]
    %v222 = vld [vmem:[#allocation5 + $0x138] sm:$0xff]
    %v223 = vld [vmem:[#allocation5 + $0x140] sm:$0xff]
    %v224 = vld [vmem:[#allocation5 + $0x148] sm:$0xff]
    %v225 = vld [vmem:[#allocation5 + $0x150] sm:$0xff]
    %v226 = vld [vmem:[#allocation5 + $0x158] sm:$0xff]
    %v227 = vld [vmem:[#allocation5 + $0x160] sm:$0xff]
    %v228 = vld [vmem:[#allocation5 + $0x168] sm:$0xff]
    %v229 = vld [vmem:[#allocation5 + $0x170] sm:$0xff]
    %v230 = vld [vmem:[#allocation5 + $0x178] sm:$0xff]
    %v231 = vld [vmem:[#allocation5 + $0x180] sm:$0xff]
    %v232 = vld [vmem:[#allocation5 + $0x188] sm:$0xff]
    %v233 = vld [vmem:[#allocation5 + $0x190] sm:$0xff]
    %v234 = vld [vmem:[#allocation5 + $0x198] sm:$0xff]
    %v235 = vld [vmem:[#allocation5 + $0x1a0] sm:$0xff]
    %v236 = vld [vmem:[#allocation5 + $0x1a8] sm:$0xff]
    %v237 = vld [vmem:[#allocation5 + $0x1b0] sm:$0xff]
    %v238 = vld [vmem:[#allocation5 + $0x1b8] sm:$0xff]
    %v239 = vld [vmem:[#allocation5 + $0x1c0] sm:$0xff]
    %v240 = vld [vmem:[#allocation5 + $0x1c8] sm:$0xff]
    %v241 = vld [vmem:[#allocation5 + $0x1d0] sm:$0xff]
    %v242 = vld [vmem:[#allocation5 + $0x1d8] sm:$0xff]
    %v243 = vld [vmem:[#allocation5 + $0x1e0] sm:$0xff]
    %v244 = vld [vmem:[#allocation5 + $0x1e8] sm:$0xff]
    %v245 = vld [vmem:[#allocation5 + $0x1f0] sm:$0xff]
    %v246 = vld [vmem:[#allocation5 + $0x1f8] sm:$0xff]
    %v247 = vld [vmem:[#allocation5 + $0x200] sm:$0xff]
    %v248 = vld [vmem:[#allocation5 + $0x208] sm:$0xff]
    %v249 = vld [vmem:[#allocation5 + $0x210] sm:$0xff]
    %v250 = vld [vmem:[#allocation5 + $0x218] sm:$0xff]
    %v251 = vld [vmem:[#allocation5 + $0x220] sm:$0xff]
    %v252 = vld [vmem:[#allocation5 + $0x228] sm:$0xff]
    %v253 = vld [vmem:[#allocation5 + $0x230] sm:$0xff]
    %v254 = vld [vmem:[#allocation5 + $0x238] sm:$0xff]
    %v255 = vld [vmem:[#allocation5 + $0x240] sm:$0xff]
    %v256 = vld [vmem:[#allocation5 + $0x248] sm:$0xff]
    %v257 = vld [vmem:[#allocation5 + $0x250] sm:$0xff]
    %v258 = vld [vmem:[#allocation5 + $0x258] sm:$0xff]
    %v259 = vld [vmem:[#allocation5 + $0x260] sm:$0xff]
    %v260 = vld [vmem:[#allocation5 + $0x268] sm:$0xff]
    %v261 = vld [vmem:[#allocation5 + $0x270] sm:$0xff]
    %v262 = vld [vmem:[#allocation5 + $0x278] sm:$0xff]
    %v263 = vld [vmem:[#allocation5 + $0x280] sm:$0xff]
    %v264 = vld [vmem:[#allocation5 + $0x288] sm:$0xff]
    %v265 = vld [vmem:[#allocation5 + $0x290] sm:$0xff]
    %v266 = vld [vmem:[#allocation5 + $0x298] sm:$0xff]
    %v267 = vld [vmem:[#allocation5 + $0x2a0] sm:$0xff]
    %v268 = vld [vmem:[#allocation5 + $0x2a8] sm:$0xff]
    %v269 = vld [vmem:[#allocation5 + $0x2b0] sm:$0xff]
    %v270 = vld [vmem:[#allocation5 + $0x2b8] sm:$0xff]
    %v271 = vld [vmem:[#allocation5 + $0x2c0] sm:$0xff]
    %v272 = vld [vmem:[#allocation5 + $0x2c8] sm:$0xff]
    %v273 = vld [vmem:[#allocation5 + $0x2d0] sm:$0xff]
    %v274 = vld [vmem:[#allocation5 + $0x2d8] sm:$0xff]
    %v275 = vld [vmem:[#allocation5 + $0x2e0] sm:$0xff]
    %v276 = vld [vmem:[#allocation5 + $0x2e8] sm:$0xff]
    %v277 = vld [vmem:[#allocation5 + $0x2f0] sm:$0xff]
    %v278 = vld [vmem:[#allocation5 + $0x2f8] sm:$0xff]
    %v279 = vld [vmem:[#allocation5 + $0x300] sm:$0xff]
    %v280 = vld [vmem:[#allocation5 + $0x308] sm:$0xff]
    %v281 = vld [vmem:[%s3] sm:$0x3]
    %v283 = vperm.slane %v281, 0
    %v284 = vperm.slane %v281, 1
    %v385 = vunpack.c.l.b16 %v183
    %v386 = vunpack.c.h.b16 %v183
    %v387 = vunpack.c.l.b16 %v184
    %v388 = vunpack.c.h.b16 %v184
    %v389 = vunpack.c.l.b16 %v185
    %v390 = vunpack.c.h.b16 %v185
    %v391 = vunpack.c.l.b16 %v186
    %v392 = vunpack.c.h.b16 %v186
    %v393 = vunpack.c.l.b16 %v187
    %v394 = vunpack.c.h.b16 %v187
    %v395 = vunpack.c.l.b16 %v188
    %v396 = vunpack.c.h.b16 %v188
    %v397 = vunpack.c.l.b16 %v189
    %v398 = vunpack.c.h.b16 %v189
    %v399 = vunpack.c.l.b16 %v190
    %v400 = vunpack.c.h.b16 %v190
    %v401 = vunpack.c.l.b16 %v191
    %v402 = vunpack.c.h.b16 %v191
    %v403 = vunpack.c.l.b16 %v192
    %v404 = vunpack.c.h.b16 %v192
    %v405 = vunpack.c.l.b16 %v193
    %v406 = vunpack.c.h.b16 %v193
    %v407 = vunpack.c.l.b16 %v194
    %v408 = vunpack.c.h.b16 %v194
    %v409 = vunpack.c.l.b16 %v195
    %v410 = vunpack.c.h.b16 %v195
    %v411 = vunpack.c.l.b16 %v196
    %v412 = vunpack.c.h.b16 %v196
    %v413 = vunpack.c.l.b16 %v197
    %v414 = vunpack.c.h.b16 %v197
    %v415 = vunpack.c.l.b16 %v198
    %v416 = vunpack.c.h.b16 %v198
    %v417 = vunpack.c.l.b16 %v199
    %v418 = vunpack.c.h.b16 %v199
    %v419 = vunpack.c.l.b16 %v200
    %v420 = vunpack.c.h.b16 %v200
    %v421 = vunpack.c.l.b16 %v201
    %v422 = vunpack.c.h.b16 %v201
    %v423 = vunpack.c.l.b16 %v202
    %v424 = vunpack.c.h.b16 %v202
    %v425 = vunpack.c.l.b16 %v203
    %v426 = vunpack.c.h.b16 %v203
    %v427 = vunpack.c.l.b16 %v204
    %v428 = vunpack.c.h.b16 %v204
    %v429 = vunpack.c.l.b16 %v205
    %v430 = vunpack.c.h.b16 %v205
    %v431 = vunpack.c.l.b16 %v206
    %v432 = vunpack.c.h.b16 %v206
    %v433 = vunpack.c.l.b16 %v207
    %v434 = vunpack.c.h.b16 %v207
    %v435 = vunpack.c.l.b16 %v208
    %v436 = vunpack.c.h.b16 %v208
    %v437 = vunpack.c.l.b16 %v209
    %v438 = vunpack.c.h.b16 %v209
    %v439 = vunpack.c.l.b16 %v210
    %v440 = vunpack.c.h.b16 %v210
    %v441 = vunpack.c.l.b16 %v211
    %v442 = vunpack.c.h.b16 %v211
    %v443 = vunpack.c.l.b16 %v212
    %v444 = vunpack.c.h.b16 %v212
    %v445 = vunpack.c.l.b16 %v213
    %v446 = vunpack.c.h.b16 %v213
    %v447 = vunpack.c.l.b16 %v214
    %v448 = vunpack.c.h.b16 %v214
    %v449 = vunpack.c.l.b16 %v215
    %v450 = vunpack.c.h.b16 %v215
    %v451 = vunpack.c.l.b16 %v216
    %v452 = vunpack.c.h.b16 %v216
    %v453 = vunpack.c.l.b16 %v217
    %v454 = vunpack.c.h.b16 %v217
    %v455 = vunpack.c.l.b16 %v218
    %v456 = vunpack.c.h.b16 %v218
    %v457 = vunpack.c.l.b16 %v219
    %v458 = vunpack.c.h.b16 %v219
    %v459 = vunpack.c.l.b16 %v220
    %v460 = vunpack.c.h.b16 %v220
    %v461 = vunpack.c.l.b16 %v221
    %v462 = vunpack.c.h.b16 %v221
    %v463 = vunpack.c.l.b16 %v222
    %v464 = vunpack.c.h.b16 %v222
    %v465 = vunpack.c.l.b16 %v223
    %v466 = vunpack.c.h.b16 %v223
    %v467 = vunpack.c.l.b16 %v224
    %v468 = vunpack.c.h.b16 %v224
    %v469 = vunpack.c.l.b16 %v225
    %v470 = vunpack.c.h.b16 %v225
    %v471 = vunpack.c.l.b16 %v226
    %v472 = vunpack.c.h.b16 %v226
    %v473 = vunpack.c.l.b16 %v227
    %v474 = vunpack.c.h.b16 %v227
    %v475 = vunpack.c.l.b16 %v228
    %v476 = vunpack.c.h.b16 %v228
    %v477 = vunpack.c.l.b16 %v229
    %v478 = vunpack.c.h.b16 %v229
    %v479 = vunpack.c.l.b16 %v230
    %v480 = vunpack.c.h.b16 %v230
    %v481 = vunpack.c.l.b16 %v231
    %v482 = vunpack.c.h.b16 %v231
    %v483 = vunpack.c.l.b16 %v232
    %v484 = vunpack.c.h.b16 %v232
    %v485 = vunpack.c.l.b16 %v233
    %v486 = vunpack.c.h.b16 %v233
    %v487 = vunpack.c.l.b16 %v234
    %v488 = vunpack.c.h.b16 %v234
    %v489 = vunpack.c.l.b16 %v235
    %v490 = vunpack.c.h.b16 %v235
    %v491 = vunpack.c.l.b16 %v236
    %v492 = vunpack.c.h.b16 %v236
    %v493 = vunpack.c.l.b16 %v237
    %v494 = vunpack.c.h.b16 %v237
    %v495 = vunpack.c.l.b16 %v238
    %v496 = vunpack.c.h.b16 %v238
    %v497 = vunpack.c.l.b16 %v239
    %v498 = vunpack.c.h.b16 %v239
    %v499 = vunpack.c.l.b16 %v240
    %v500 = vunpack.c.h.b16 %v240
    %v501 = vunpack.c.l.b16 %v241
    %v502 = vunpack.c.h.b16 %v241
    %v503 = vunpack.c.l.b16 %v242
    %v504 = vunpack.c.h.b16 %v242
    %v505 = vunpack.c.l.b16 %v243
    %v506 = vunpack.c.h.b16 %v243
    %v507 = vunpack.c.l.b16 %v244
    %v508 = vunpack.c.h.b16 %v244
    %v509 = vunpack.c.l.b16 %v245
    %v510 = vunpack.c.h.b16 %v245
    %v511 = vunpack.c.l.b16 %v246
    %v512 = vunpack.c.h.b16 %v246
    %v513 = vunpack.c.l.b16 %v247
    %v514 = vunpack.c.h.b16 %v247
    %v515 = vunpack.c.l.b16 %v248
    %v516 = vunpack.c.h.b16 %v248
    %v517 = vunpack.c.l.b16 %v249
    %v518 = vunpack.c.h.b16 %v249
    %v519 = vunpack.c.l.b16 %v250
    %v520 = vunpack.c.h.b16 %v250
    %v521 = vunpack.c.l.b16 %v251
    %v522 = vunpack.c.h.b16 %v251
    %v523 = vunpack.c.l.b16 %v252
    %v524 = vunpack.c.h.b16 %v252
    %v525 = vunpack.c.l.b16 %v253
    %v526 = vunpack.c.h.b16 %v253
    %v527 = vunpack.c.l.b16 %v254
    %v528 = vunpack.c.h.b16 %v254
    %v529 = vunpack.c.l.b16 %v255
    %v530 = vunpack.c.h.b16 %v255
    %v531 = vunpack.c.l.b16 %v256
    %v532 = vunpack.c.h.b16 %v256
    %v533 = vunpack.c.l.b16 %v257
    %v534 = vunpack.c.h.b16 %v257
    %v535 = vunpack.c.l.b16 %v258
    %v536 = vunpack.c.h.b16 %v258
    %v537 = vunpack.c.l.b16 %v259
    %v538 = vunpack.c.h.b16 %v259
    %v539 = vunpack.c.l.b16 %v260
    %v540 = vunpack.c.h.b16 %v260
    %v541 = vunpack.c.l.b16 %v261
    %v542 = vunpack.c.h.b16 %v261
    %v543 = vunpack.c.l.b16 %v262
    %v544 = vunpack.c.h.b16 %v262
    %v545 = vunpack.c.l.b16 %v263
    %v546 = vunpack.c.h.b16 %v263
    %v547 = vunpack.c.l.b16 %v264
    %v548 = vunpack.c.h.b16 %v264
    %v549 = vunpack.c.l.b16 %v265
    %v550 = vunpack.c.h.b16 %v265
    %v551 = vunpack.c.l.b16 %v266
    %v552 = vunpack.c.h.b16 %v266
    %v553 = vunpack.c.l.b16 %v267
    %v554 = vunpack.c.h.b16 %v267
    %v555 = vunpack.c.l.b16 %v268
    %v556 = vunpack.c.h.b16 %v268
    %v557 = vunpack.c.l.b16 %v269
    %v558 = vunpack.c.h.b16 %v269
    %v559 = vunpack.c.l.b16 %v270
    %v560 = vunpack.c.h.b16 %v270
    %v561 = vunpack.c.l.b16 %v271
    %v562 = vunpack.c.h.b16 %v271
    %v563 = vunpack.c.l.b16 %v272
    %v564 = vunpack.c.h.b16 %v272
    %v565 = vunpack.c.l.b16 %v273
    %v566 = vunpack.c.h.b16 %v273
    %v567 = vunpack.c.l.b16 %v274
    %v568 = vunpack.c.h.b16 %v274
    %v569 = vunpack.c.l.b16 %v275
    %v570 = vunpack.c.h.b16 %v275
    %v571 = vunpack.c.l.b16 %v276
    %v572 = vunpack.c.h.b16 %v276
    %v573 = vunpack.c.l.b16 %v277
    %v574 = vunpack.c.h.b16 %v277
    %v575 = vunpack.c.l.b16 %v278
    %v576 = vunpack.c.h.b16 %v278
    %v577 = vunpack.c.l.b16 %v279
    %v578 = vunpack.c.h.b16 %v279
    %v579 = vunpack.c.l.b16 %v280
    %v580 = vunpack.c.h.b16 %v280
    %v581 = vpack.c.b16 %v387, %v385
    %v582 = vpack.c.b16 %v388, %v386
    %v583 = vpack.c.b16 %v391, %v389
    %v584 = vpack.c.b16 %v392, %v390
    %v585 = vpack.c.b16 %v395, %v393
    %v586 = vpack.c.b16 %v396, %v394
    %v587 = vpack.c.b16 %v399, %v397
    %v588 = vpack.c.b16 %v400, %v398
    %v589 = vpack.c.b16 %v403, %v401
    %v590 = vpack.c.b16 %v404, %v402
    %v591 = vpack.c.b16 %v407, %v405
    %v592 = vpack.c.b16 %v408, %v406
    %v593 = vpack.c.b16 %v411, %v409
    %v594 = vpack.c.b16 %v412, %v410
    %v595 = vpack.c.b16 %v415, %v413
    %v596 = vpack.c.b16 %v416, %v414
    %v597 = vpack.c.b16 %v419, %v417
    %v598 = vpack.c.b16 %v420, %v418
    %v599 = vpack.c.b16 %v423, %v421
    %v600 = vpack.c.b16 %v424, %v422
    %v601 = vpack.c.b16 %v427, %v425
    %v602 = vpack.c.b16 %v428, %v426
    %v603 = vpack.c.b16 %v431, %v429
    %v604 = vpack.c.b16 %v432, %v430
    %v605 = vpack.c.b16 %v435, %v433
    %v606 = vpack.c.b16 %v436, %v434
    %v607 = vpack.c.b16 %v439, %v437
    %v608 = vpack.c.b16 %v440, %v438
    %v609 = vpack.c.b16 %v443, %v441
    %v610 = vpack.c.b16 %v444, %v442
    %v611 = vpack.c.b16 %v447, %v445
    %v612 = vpack.c.b16 %v448, %v446
    %v613 = vpack.c.b16 %v451, %v449
    %v614 = vpack.c.b16 %v452, %v450
    %v615 = vpack.c.b16 %v455, %v453
    %v616 = vpack.c.b16 %v456, %v454
    %v617 = vpack.c.b16 %v459, %v457
    %v618 = vpack.c.b16 %v460, %v458
    %v619 = vpack.c.b16 %v463, %v461
    %v620 = vpack.c.b16 %v464, %v462
    %v621 = vpack.c.b16 %v467, %v465
    %v622 = vpack.c.b16 %v468, %v466
    %v623 = vpack.c.b16 %v471, %v469
    %v624 = vpack.c.b16 %v472, %v470
    %v625 = vpack.c.b16 %v475, %v473
    %v626 = vpack.c.b16 %v476, %v474
    %v627 = vpack.c.b16 %v479, %v477
    %v628 = vpack.c.b16 %v480, %v478
    %v629 = vpack.c.b16 %v483, %v481
    %v630 = vpack.c.b16 %v484, %v482
    %v631 = vpack.c.b16 %v487, %v485
    %v632 = vpack.c.b16 %v488, %v486
    %v633 = vpack.c.b16 %v491, %v489
    %v634 = vpack.c.b16 %v492, %v490
    %v635 = vpack.c.b16 %v495, %v493
    %v636 = vpack.c.b16 %v496, %v494
    %v637 = vpack.c.b16 %v499, %v497
    %v638 = vpack.c.b16 %v500, %v498
    %v639 = vpack.c.b16 %v503, %v501
    %v640 = vpack.c.b16 %v504, %v502
    %v641 = vpack.c.b16 %v507, %v505
    %v642 = vpack.c.b16 %v508, %v506
    %v643 = vpack.c.b16 %v511, %v509
    %v644 = vpack.c.b16 %v512, %v510
    %v645 = vpack.c.b16 %v515, %v513
    %v646 = vpack.c.b16 %v516, %v514
    %v647 = vpack.c.b16 %v519, %v517
    %v648 = vpack.c.b16 %v520, %v518
    %v649 = vpack.c.b16 %v523, %v521
    %v650 = vpack.c.b16 %v524, %v522
    %v651 = vpack.c.b16 %v527, %v525
    %v652 = vpack.c.b16 %v528, %v526
    %v653 = vpack.c.b16 %v531, %v529
    %v654 = vpack.c.b16 %v532, %v530
    %v655 = vpack.c.b16 %v535, %v533
    %v656 = vpack.c.b16 %v536, %v534
    %v657 = vpack.c.b16 %v539, %v537
    %v658 = vpack.c.b16 %v540, %v538
    %v659 = vpack.c.b16 %v543, %v541
    %v660 = vpack.c.b16 %v544, %v542
    %v661 = vpack.c.b16 %v547, %v545
    %v662 = vpack.c.b16 %v548, %v546
    %v663 = vpack.c.b16 %v551, %v549
    %v664 = vpack.c.b16 %v552, %v550
    %v665 = vpack.c.b16 %v555, %v553
    %v666 = vpack.c.b16 %v556, %v554
    %v667 = vpack.c.b16 %v559, %v557
    %v668 = vpack.c.b16 %v560, %v558
    %v669 = vpack.c.b16 %v563, %v561
    %v670 = vpack.c.b16 %v564, %v562
    %v671 = vpack.c.b16 %v567, %v565
    %v672 = vpack.c.b16 %v568, %v566
    %v673 = vpack.c.b16 %v571, %v569
    %v674 = vpack.c.b16 %v572, %v570
    %v675 = vpack.c.b16 %v575, %v573
    %v676 = vpack.c.b16 %v576, %v574
    %v677 = vpack.c.b16 %v579, %v577
    %v678 = vpack.c.b16 %v580, %v578
    %vm777 = vcmask 130048
    %v779 = vsel %vm777, %v180, 0
    %781 = vmatpush.bf16.msra.mxu0 %v595
    %782 = vmatpush.bf16.msra.mxu0 %v593
    %783 = vmatpush.bf16.msra.mxu0 %v591
    %784 = vmatpush.bf16.msra.mxu0 %v589
    %785 = vmatpush.bf16.msra.mxu0 %v587
    %786 = vmatpush.bf16.msra.mxu0 %v585
    %787 = vmatpush.bf16.msra.mxu0 %v583
    %788 = vmatpush.bf16.msra.mxu0 %v581
    %789 = vmatmul.bf16.gmra.mxu0 %v174
    %v790 = vpop.f32.mrf.mxu0
    %v791 = vadd.f32 %v283, %v790
    %v792 = vpop.f32.mrf.mxu0
    %v793 = vadd.f32 %v283, %v792
    %794 = vdwg.mxu0
    %795 = vmatpush.bf16.msra.mxu0 %v611
    %796 = vmatpush.bf16.msra.mxu0 %v609
    %797 = vmatpush.bf16.msra.mxu0 %v607
    %798 = vmatpush.bf16.msra.mxu0 %v605
    %799 = vmatpush.bf16.msra.mxu0 %v603
    %800 = vmatpush.bf16.msra.mxu0 %v601
    %801 = vmatpush.bf16.msra.mxu0 %v599
    %802 = vmatpush.bf16.msra.mxu0 %v597
    %803 = vmatmul.bf16.gmra.mxu0 %v175
    %v804 = vpop.f32.mrf.mxu0
    %v805 = vadd.f32 %v791, %v804
    %v806 = vpop.f32.mrf.mxu0
    %v807 = vadd.f32 %v793, %v806
    %808 = vdwg.mxu0
    %809 = vmatpush.bf16.msra.mxu0 %v627
    %810 = vmatpush.bf16.msra.mxu0 %v625
    %811 = vmatpush.bf16.msra.mxu0 %v623
    %812 = vmatpush.bf16.msra.mxu0 %v621
    %813 = vmatpush.bf16.msra.mxu0 %v619
    %814 = vmatpush.bf16.msra.mxu0 %v617
    %815 = vmatpush.bf16.msra.mxu0 %v615
    %816 = vmatpush.bf16.msra.mxu0 %v613
    %817 = vmatmul.bf16.gmra.mxu0 %v176
    %v818 = vpop.f32.mrf.mxu0
    %v819 = vadd.f32 %v805, %v818
    %v820 = vpop.f32.mrf.mxu0
    %v821 = vadd.f32 %v807, %v820
    %822 = vdwg.mxu0
    %823 = vmatpush.bf16.msra.mxu0 %v643
    %824 = vmatpush.bf16.msra.mxu0 %v641
    %825 = vmatpush.bf16.msra.mxu0 %v639
    %826 = vmatpush.bf16.msra.mxu0 %v637
    %827 = vmatpush.bf16.msra.mxu0 %v635
    %828 = vmatpush.bf16.msra.mxu0 %v633
    %829 = vmatpush.bf16.msra.mxu0 %v631
    %830 = vmatpush.bf16.msra.mxu0 %v629
    %831 = vmatmul.bf16.gmra.mxu0 %v177
    %v832 = vpop.f32.mrf.mxu0
    %v833 = vadd.f32 %v819, %v832
    %v834 = vpop.f32.mrf.mxu0
    %v835 = vadd.f32 %v821, %v834
    %836 = vdwg.mxu0
    %837 = vmatpush.bf16.msra.mxu0 %v659
    %838 = vmatpush.bf16.msra.mxu0 %v657
    %839 = vmatpush.bf16.msra.mxu0 %v655
    %840 = vmatpush.bf16.msra.mxu0 %v653
    %841 = vmatpush.bf16.msra.mxu0 %v651
    %842 = vmatpush.bf16.msra.mxu0 %v649
    %843 = vmatpush.bf16.msra.mxu0 %v647
    %844 = vmatpush.bf16.msra.mxu0 %v645
    %845 = vmatmul.bf16.gmra.mxu0 %v178
    %v846 = vpop.f32.mrf.mxu0
    %v847 = vadd.f32 %v833, %v846
    %v848 = vpop.f32.mrf.mxu0
    %v849 = vadd.f32 %v835, %v848
    %850 = vdwg.mxu0
    %851 = vmatpush.bf16.msra.mxu0 %v675
    %852 = vmatpush.bf16.msra.mxu0 %v673
    %853 = vmatpush.bf16.msra.mxu0 %v671
    %854 = vmatpush.bf16.msra.mxu0 %v669
    %855 = vmatpush.bf16.msra.mxu0 %v667
    %856 = vmatpush.bf16.msra.mxu0 %v665
    %857 = vmatpush.bf16.msra.mxu0 %v663
    %858 = vmatpush.bf16.msra.mxu0 %v661
    %859 = vmatmul.bf16.gmra.mxu0 %v179
    %v860 = vpop.f32.mrf.mxu0
    %v861 = vadd.f32 %v847, %v860
    %v862 = vpop.f32.mrf.mxu0
    %v863 = vadd.f32 %v849, %v862
    %864 = vdwg.mxu0
    %865 = vmatpush.bf16.msra.mxu0 0
    %866 = vmatpush.bf16.msra.mxu0 0
    %867 = vmatpush.bf16.msra.mxu0 0
    %868 = vmatpush.bf16.msra.mxu0 0
    %869 = vmatpush.bf16.msra.mxu0 0
    %870 = vmatpush.bf16.msra.mxu0 0
    %871 = vmatpush.bf16.msra.mxu0 0
    %872 = vmatpush.bf16.msra.mxu0 %v677
    %873 = vmatmul.bf16.gmra.mxu0 %v779
    %v874 = vpop.f32.mrf.mxu0
    %v875 = vadd.f32 %v861, %v874
    %v876 = vpop.f32.mrf.mxu0
    %v877 = vadd.f32 %v863, %v876
    %878 = vdwg.mxu0
    %879 = vmatpush.bf16.msra.mxu0 %v596
    %880 = vmatpush.bf16.msra.mxu0 %v594
    %881 = vmatpush.bf16.msra.mxu0 %v592
    %882 = vmatpush.bf16.msra.mxu0 %v590
    %883 = vmatpush.bf16.msra.mxu0 %v588
    %884 = vmatpush.bf16.msra.mxu0 %v586
    %885 = vmatpush.bf16.msra.mxu0 %v584
    %886 = vmatpush.bf16.msra.mxu0 %v582
    %887 = vmatmul.bf16.gmra.mxu0 %v174
    %v888 = vpop.f32.mrf.mxu0
    %v889 = vadd.f32 %v284, %v888
    %v890 = vpop.f32.mrf.mxu0
    %v891 = vadd.f32 %v284, %v890
    %892 = vdwg.mxu0
    %893 = vmatpush.bf16.msra.mxu0 %v612
    %894 = vmatpush.bf16.msra.mxu0 %v610
    %895 = vmatpush.bf16.msra.mxu0 %v608
    %896 = vmatpush.bf16.msra.mxu0 %v606
    %897 = vmatpush.bf16.msra.mxu0 %v604
    %898 = vmatpush.bf16.msra.mxu0 %v602
    %899 = vmatpush.bf16.msra.mxu0 %v600
    %900 = vmatpush.bf16.msra.mxu0 %v598
    %901 = vmatmul.bf16.gmra.mxu0 %v175
    %v902 = vpop.f32.mrf.mxu0
    %v903 = vadd.f32 %v889, %v902
    %v904 = vpop.f32.mrf.mxu0
    %v905 = vadd.f32 %v891, %v904
    %906 = vdwg.mxu0
    %907 = vmatpush.bf16.msra.mxu0 %v628
    %908 = vmatpush.bf16.msra.mxu0 %v626
    %909 = vmatpush.bf16.msra.mxu0 %v624
    %910 = vmatpush.bf16.msra.mxu0 %v622
    %911 = vmatpush.bf16.msra.mxu0 %v620
    %912 = vmatpush.bf16.msra.mxu0 %v618
    %913 = vmatpush.bf16.msra.mxu0 %v616
    %914 = vmatpush.bf16.msra.mxu0 %v614
    %915 = vmatmul.bf16.gmra.mxu0 %v176
    %v916 = vpop.f32.mrf.mxu0
    %v917 = vadd.f32 %v903, %v916
    %v918 = vpop.f32.mrf.mxu0
    %v919 = vadd.f32 %v905, %v918
    %920 = vdwg.mxu0
    %921 = vmatpush.bf16.msra.mxu0 %v644
    %922 = vmatpush.bf16.msra.mxu0 %v642
    %923 = vmatpush.bf16.msra.mxu0 %v640
    %924 = vmatpush.bf16.msra.mxu0 %v638
    %925 = vmatpush.bf16.msra.mxu0 %v636
    %926 = vmatpush.bf16.msra.mxu0 %v634
    %927 = vmatpush.bf16.msra.mxu0 %v632
    %928 = vmatpush.bf16.msra.mxu0 %v630
    %929 = vmatmul.bf16.gmra.mxu0 %v177
    %v930 = vpop.f32.mrf.mxu0
    %v931 = vadd.f32 %v917, %v930
    %v932 = vpop.f32.mrf.mxu0
    %v933 = vadd.f32 %v919, %v932
    %934 = vdwg.mxu0
    %935 = vmatpush.bf16.msra.mxu0 %v660
    %936 = vmatpush.bf16.msra.mxu0 %v658
    %937 = vmatpush.bf16.msra.mxu0 %v656
    %938 = vmatpush.bf16.msra.mxu0 %v654
    %939 = vmatpush.bf16.msra.mxu0 %v652
    %940 = vmatpush.bf16.msra.mxu0 %v650
    %941 = vmatpush.bf16.msra.mxu0 %v648
    %942 = vmatpush.bf16.msra.mxu0 %v646
    %943 = vmatmul.bf16.gmra.mxu0 %v178
    %v944 = vpop.f32.mrf.mxu0
    %v945 = vadd.f32 %v931, %v944
    %v946 = vpop.f32.mrf.mxu0
    %v947 = vadd.f32 %v933, %v946
    %948 = vdwg.mxu0
    %949 = vmatpush.bf16.msra.mxu0 %v676
    %950 = vmatpush.bf16.msra.mxu0 %v674
    %951 = vmatpush.bf16.msra.mxu0 %v672
    %952 = vmatpush.bf16.msra.mxu0 %v670
    %953 = vmatpush.bf16.msra.mxu0 %v668
    %954 = vmatpush.bf16.msra.mxu0 %v666
    %955 = vmatpush.bf16.msra.mxu0 %v664
    %956 = vmatpush.bf16.msra.mxu0 %v662
    %957 = vmatmul.bf16.gmra.mxu0 %v179
    %v958 = vpop.f32.mrf.mxu0
    %v959 = vadd.f32 %v945, %v958
    %v960 = vpop.f32.mrf.mxu0
    %v961 = vadd.f32 %v947, %v960
    %962 = vdwg.mxu0
    %963 = vmatpush.bf16.msra.mxu0 0
    %964 = vmatpush.bf16.msra.mxu0 0
    %965 = vmatpush.bf16.msra.mxu0 0
    %966 = vmatpush.bf16.msra.mxu0 0
    %967 = vmatpush.bf16.msra.mxu0 0
    %968 = vmatpush.bf16.msra.mxu0 0
    %969 = vmatpush.bf16.msra.mxu0 0
    %970 = vmatpush.bf16.msra.mxu0 %v678
    %971 = vmatmul.bf16.gmra.mxu0 %v779
    %v972 = vpop.f32.mrf.mxu0
    %v973 = vadd.f32 %v959, %v972
    %v974 = vpop.f32.mrf.mxu0
    %v975 = vadd.f32 %v961, %v974
    %976 = vdwg.mxu0
    %v977 = vtanh.pop %v875
    %v978 = vtanh.pop %v973
    %v979 = vtanh.pop %v877
    %v980 = vtanh.pop %v975
    %v981 = vpack.c.bf16 %v979, %v977
    %v982 = vpack.c.bf16 %v980, %v978
    %v983 = vld [vmem:[#allocation7] sm:$0xff]
    %v984 = vld [vmem:[#allocation7 + $0x8] sm:$0xff]
    %v985 = vld [vmem:[#allocation7 + $0x10] sm:$0xff]
    %v986 = vld [vmem:[#allocation7 + $0x18] sm:$0xff]
    %v987 = vld [vmem:[#allocation7 + $0x20] sm:$0xff]
    %v988 = vld [vmem:[#allocation7 + $0x28] sm:$0xff]
    %v989 = vld [vmem:[#allocation7 + $0x30] sm:$0xff]
    %v990 = vld [vmem:[#allocation7 + $0x38] sm:$0xff]
    %v991 = vld [vmem:[#allocation7 + $0x40] sm:$0xff]
    %v992 = vld [vmem:[#allocation7 + $0x48] sm:$0xff]
    %v993 = vld [vmem:[#allocation7 + $0x50] sm:$0xff]
    %v994 = vld [vmem:[#allocation7 + $0x58] sm:$0xff]
    %v995 = vld [vmem:[#allocation7 + $0x60] sm:$0xff]
    %v996 = vld [vmem:[#allocation7 + $0x68] sm:$0xff]
    %v997 = vld [vmem:[#allocation7 + $0x70] sm:$0xff]
    %v998 = vld [vmem:[#allocation7 + $0x78] sm:$0xff]
    %v999 = vld [vmem:[#allocation7 + $0x80] sm:$0xff]
    %v1000 = vld [vmem:[#allocation7 + $0x88] sm:$0xff]
    %v1001 = vld [vmem:[#allocation7 + $0x90] sm:$0xff]
    %v1002 = vld [vmem:[#allocation7 + $0x98] sm:$0xff]
    %v1003 = vld [vmem:[#allocation7 + $0xa0] sm:$0xff]
    %v1004 = vld [vmem:[#allocation7 + $0xa8] sm:$0xff]
    %v1005 = vld [vmem:[#allocation7 + $0xb0] sm:$0xff]
    %v1006 = vld [vmem:[#allocation7 + $0xb8] sm:$0xff]
    %v1007 = vld [vmem:[#allocation7 + $0xc0] sm:$0xff]
    %v1008 = vld [vmem:[#allocation7 + $0xc8] sm:$0xff]
    %v1009 = vld [vmem:[#allocation7 + $0xd0] sm:$0xff]
    %v1010 = vld [vmem:[#allocation7 + $0xd8] sm:$0xff]
    %v1011 = vld [vmem:[#allocation7 + $0xe0] sm:$0xff]
    %v1012 = vld [vmem:[#allocation7 + $0xe8] sm:$0xff]
    %v1013 = vld [vmem:[#allocation7 + $0xf0] sm:$0xff]
    %v1014 = vld [vmem:[#allocation7 + $0xf8] sm:$0xff]
    %v1015 = vld [vmem:[%s5] sm:$0x3]
    %v1017 = vperm.slane %v1015, 0
    %v1018 = vperm.slane %v1015, 1
    %v1053 = vunpack.c.l.b16 %v983
    %v1054 = vunpack.c.h.b16 %v983
    %v1055 = vunpack.c.l.b16 %v984
    %v1056 = vunpack.c.h.b16 %v984
    %v1057 = vunpack.c.l.b16 %v985
    %v1058 = vunpack.c.h.b16 %v985
    %v1059 = vunpack.c.l.b16 %v986
    %v1060 = vunpack.c.h.b16 %v986
    %v1061 = vunpack.c.l.b16 %v987
    %v1062 = vunpack.c.h.b16 %v987
    %v1063 = vunpack.c.l.b16 %v988
    %v1064 = vunpack.c.h.b16 %v988
    %v1065 = vunpack.c.l.b16 %v989
    %v1066 = vunpack.c.h.b16 %v989
    %v1067 = vunpack.c.l.b16 %v990
    %v1068 = vunpack.c.h.b16 %v990
    %v1069 = vunpack.c.l.b16 %v991
    %v1070 = vunpack.c.h.b16 %v991
    %v1071 = vunpack.c.l.b16 %v992
    %v1072 = vunpack.c.h.b16 %v992
    %v1073 = vunpack.c.l.b16 %v993
    %v1074 = vunpack.c.h.b16 %v993
    %v1075 = vunpack.c.l.b16 %v994
    %v1076 = vunpack.c.h.b16 %v994
    %v1077 = vunpack.c.l.b16 %v995
    %v1078 = vunpack.c.h.b16 %v995
    %v1079 = vunpack.c.l.b16 %v996
    %v1080 = vunpack.c.h.b16 %v996
    %v1081 = vunpack.c.l.b16 %v997
    %v1082 = vunpack.c.h.b16 %v997
    %v1083 = vunpack.c.l.b16 %v998
    %v1084 = vunpack.c.h.b16 %v998
    %v1085 = vunpack.c.l.b16 %v999
    %v1086 = vunpack.c.h.b16 %v999
    %v1087 = vunpack.c.l.b16 %v1000
    %v1088 = vunpack.c.h.b16 %v1000
    %v1089 = vunpack.c.l.b16 %v1001
    %v1090 = vunpack.c.h.b16 %v1001
    %v1091 = vunpack.c.l.b16 %v1002
    %v1092 = vunpack.c.h.b16 %v1002
    %v1093 = vunpack.c.l.b16 %v1003
    %v1094 = vunpack.c.h.b16 %v1003
    %v1095 = vunpack.c.l.b16 %v1004
    %v1096 = vunpack.c.h.b16 %v1004
    %v1097 = vunpack.c.l.b16 %v1005
    %v1098 = vunpack.c.h.b16 %v1005
    %v1099 = vunpack.c.l.b16 %v1006
    %v1100 = vunpack.c.h.b16 %v1006
    %v1101 = vunpack.c.l.b16 %v1007
    %v1102 = vunpack.c.h.b16 %v1007
    %v1103 = vunpack.c.l.b16 %v1008
    %v1104 = vunpack.c.h.b16 %v1008
    %v1105 = vunpack.c.l.b16 %v1009
    %v1106 = vunpack.c.h.b16 %v1009
    %v1107 = vunpack.c.l.b16 %v1010
    %v1108 = vunpack.c.h.b16 %v1010
    %v1109 = vunpack.c.l.b16 %v1011
    %v1110 = vunpack.c.h.b16 %v1011
    %v1111 = vunpack.c.l.b16 %v1012
    %v1112 = vunpack.c.h.b16 %v1012
    %v1113 = vunpack.c.l.b16 %v1013
    %v1114 = vunpack.c.h.b16 %v1013
    %v1115 = vunpack.c.l.b16 %v1014
    %v1116 = vunpack.c.h.b16 %v1014
    %v1117 = vpack.c.b16 %v1055, %v1053
    %v1118 = vpack.c.b16 %v1056, %v1054
    %v1119 = vpack.c.b16 %v1059, %v1057
    %v1120 = vpack.c.b16 %v1060, %v1058
    %v1121 = vpack.c.b16 %v1063, %v1061
    %v1122 = vpack.c.b16 %v1064, %v1062
    %v1123 = vpack.c.b16 %v1067, %v1065
    %v1124 = vpack.c.b16 %v1068, %v1066
    %v1125 = vpack.c.b16 %v1071, %v1069
    %v1126 = vpack.c.b16 %v1072, %v1070
    %v1127 = vpack.c.b16 %v1075, %v1073
    %v1128 = vpack.c.b16 %v1076, %v1074
    %v1129 = vpack.c.b16 %v1079, %v1077
    %v1130 = vpack.c.b16 %v1080, %v1078
    %v1131 = vpack.c.b16 %v1083, %v1081
    %v1132 = vpack.c.b16 %v1084, %v1082
    %v1133 = vpack.c.b16 %v1087, %v1085
    %v1134 = vpack.c.b16 %v1088, %v1086
    %v1135 = vpack.c.b16 %v1091, %v1089
    %v1136 = vpack.c.b16 %v1092, %v1090
    %v1137 = vpack.c.b16 %v1095, %v1093
    %v1138 = vpack.c.b16 %v1096, %v1094
    %v1139 = vpack.c.b16 %v1099, %v1097
    %v1140 = vpack.c.b16 %v1100, %v1098
    %v1141 = vpack.c.b16 %v1103, %v1101
    %v1142 = vpack.c.b16 %v1104, %v1102
    %v1143 = vpack.c.b16 %v1107, %v1105
    %v1144 = vpack.c.b16 %v1108, %v1106
    %v1145 = vpack.c.b16 %v1111, %v1109
    %v1146 = vpack.c.b16 %v1112, %v1110
    %v1147 = vpack.c.b16 %v1115, %v1113
    %v1148 = vpack.c.b16 %v1116, %v1114
    %1181 = vmatpush.bf16.msra.mxu0 %v1131
    %1182 = vmatpush.bf16.msra.mxu0 %v1129
    %1183 = vmatpush.bf16.msra.mxu0 %v1127
    %1184 = vmatpush.bf16.msra.mxu0 %v1125
    %1185 = vmatpush.bf16.msra.mxu0 %v1123
    %1186 = vmatpush.bf16.msra.mxu0 %v1121
    %1187 = vmatpush.bf16.msra.mxu0 %v1119
    %1188 = vmatpush.bf16.msra.mxu0 %v1117
    %1189 = vmatmul.bf16.gmra.mxu0 %v981
    %v1190 = vpop.f32.mrf.mxu0
    %v1191 = vadd.f32 %v1017, %v1190
    %v1192 = vpop.f32.mrf.mxu0
    %v1193 = vadd.f32 %v1017, %v1192
    %1194 = vdwg.mxu0
    %1195 = vmatpush.bf16.msra.mxu0 %v1147
    %1196 = vmatpush.bf16.msra.mxu0 %v1145
    %1197 = vmatpush.bf16.msra.mxu0 %v1143
    %1198 = vmatpush.bf16.msra.mxu0 %v1141
    %1199 = vmatpush.bf16.msra.mxu0 %v1139
    %1200 = vmatpush.bf16.msra.mxu0 %v1137
    %1201 = vmatpush.bf16.msra.mxu0 %v1135
    %1202 = vmatpush.bf16.msra.mxu0 %v1133
    %1203 = vmatmul.bf16.gmra.mxu0 %v982
    %v1204 = vpop.f32.mrf.mxu0
    %v1205 = vadd.f32 %v1191, %v1204
    %v1206 = vpop.f32.mrf.mxu0
    %v1207 = vadd.f32 %v1193, %v1206
    %1208 = vdwg.mxu0
    %1209 = vmatpush.bf16.msra.mxu0 %v1132
    %1210 = vmatpush.bf16.msra.mxu0 %v1130
    %1211 = vmatpush.bf16.msra.mxu0 %v1128
    %1212 = vmatpush.bf16.msra.mxu0 %v1126
    %1213 = vmatpush.bf16.msra.mxu0 %v1124
    %1214 = vmatpush.bf16.msra.mxu0 %v1122
    %1215 = vmatpush.bf16.msra.mxu0 %v1120
    %1216 = vmatpush.bf16.msra.mxu0 %v1118
    %1217 = vmatmul.bf16.gmra.mxu0 %v981
    %v1218 = vpop.f32.mrf.mxu0
    %v1219 = vadd.f32 %v1018, %v1218
    %v1220 = vpop.f32.mrf.mxu0
    %v1221 = vadd.f32 %v1018, %v1220
    %1222 = vdwg.mxu0
    %1223 = vmatpush.bf16.msra.mxu0 %v1148
    %1224 = vmatpush.bf16.msra.mxu0 %v1146
    %1225 = vmatpush.bf16.msra.mxu0 %v1144
    %1226 = vmatpush.bf16.msra.mxu0 %v1142
    %1227 = vmatpush.bf16.msra.mxu0 %v1140
    %1228 = vmatpush.bf16.msra.mxu0 %v1138
    %1229 = vmatpush.bf16.msra.mxu0 %v1136
    %1230 = vmatpush.bf16.msra.mxu0 %v1134
    %1231 = vmatmul.bf16.gmra.mxu0 %v982
    %v1232 = vpop.f32.mrf.mxu0
    %v1233 = vadd.f32 %v1219, %v1232
    %v1234 = vpop.f32.mrf.mxu0
    %v1235 = vadd.f32 %v1221, %v1234
    %1236 = vdwg.mxu0
    %v1237 = vtanh.pop %v1205
    %v1238 = vtanh.pop %v1233
    %v1239 = vtanh.pop %v1207
    %v1240 = vtanh.pop %v1235
    %v1241 = vpack.c.bf16 %v1239, %v1237
    %v1242 = vpack.c.bf16 %v1240, %v1238
    %v1243 = vld [vmem:[#allocation8] sm:$0xff]
    %v1244 = vld [vmem:[#allocation8 + $0x8] sm:$0xff]
    %v1245 = vld [vmem:[#allocation8 + $0x10] sm:$0xff]
    %v1246 = vld [vmem:[#allocation8 + $0x18] sm:$0xff]
    %v1247 = vld [vmem:[#allocation8 + $0x20] sm:$0xff]
    %v1248 = vld [vmem:[#allocation8 + $0x28] sm:$0xff]
    %v1249 = vld [vmem:[#allocation8 + $0x30] sm:$0xff]
    %v1250 = vld [vmem:[#allocation8 + $0x38] sm:$0xff]
    %v1251 = vld [vmem:[#allocation8 + $0x40] sm:$0xff]
    %v1252 = vld [vmem:[#allocation8 + $0x48] sm:$0xff]
    %v1253 = vld [vmem:[#allocation8 + $0x50] sm:$0xff]
    %v1254 = vld [vmem:[#allocation8 + $0x58] sm:$0xff]
    %v1255 = vld [vmem:[#allocation8 + $0x60] sm:$0xff]
    %v1256 = vld [vmem:[#allocation8 + $0x68] sm:$0xff]
    %v1257 = vld [vmem:[#allocation8 + $0x70] sm:$0xff]
    %v1258 = vld [vmem:[#allocation8 + $0x78] sm:$0xff]
    %v1259 = vld [vmem:[#allocation8 + $0x80] sm:$0xff]
    %v1260 = vld [vmem:[#allocation8 + $0x88] sm:$0xff]
    %v1261 = vld [vmem:[#allocation8 + $0x90] sm:$0xff]
    %v1262 = vld [vmem:[#allocation8 + $0x98] sm:$0xff]
    %v1263 = vld [vmem:[#allocation8 + $0xa0] sm:$0xff]
    %v1264 = vld [vmem:[#allocation8 + $0xa8] sm:$0xff]
    %v1265 = vld [vmem:[#allocation8 + $0xb0] sm:$0xff]
    %v1266 = vld [vmem:[#allocation8 + $0xb8] sm:$0xff]
    %v1267 = vld [vmem:[#allocation8 + $0xc0] sm:$0xff]
    %v1268 = vld [vmem:[#allocation8 + $0xc8] sm:$0xff]
    %v1269 = vld [vmem:[#allocation8 + $0xd0] sm:$0xff]
    %v1270 = vld [vmem:[#allocation8 + $0xd8] sm:$0xff]
    %v1271 = vld [vmem:[#allocation8 + $0xe0] sm:$0xff]
    %v1272 = vld [vmem:[#allocation8 + $0xe8] sm:$0xff]
    %v1273 = vld [vmem:[#allocation8 + $0xf0] sm:$0xff]
    %v1274 = vld [vmem:[#allocation8 + $0xf8] sm:$0xff]
    %v1275 = vld [vmem:[%s7] sm:$0x3]
    %v1277 = vperm.slane %v1275, 0
    %v1278 = vperm.slane %v1275, 1
    %v1313 = vunpack.c.l.b16 %v1243
    %v1314 = vunpack.c.h.b16 %v1243
    %v1315 = vunpack.c.l.b16 %v1244
    %v1316 = vunpack.c.h.b16 %v1244
    %v1317 = vunpack.c.l.b16 %v1245
    %v1318 = vunpack.c.h.b16 %v1245
    %v1319 = vunpack.c.l.b16 %v1246
    %v1320 = vunpack.c.h.b16 %v1246
    %v1321 = vunpack.c.l.b16 %v1247
    %v1322 = vunpack.c.h.b16 %v1247
    %v1323 = vunpack.c.l.b16 %v1248
    %v1324 = vunpack.c.h.b16 %v1248
    %v1325 = vunpack.c.l.b16 %v1249
    %v1326 = vunpack.c.h.b16 %v1249
    %v1327 = vunpack.c.l.b16 %v1250
    %v1328 = vunpack.c.h.b16 %v1250
    %v1329 = vunpack.c.l.b16 %v1251
    %v1330 = vunpack.c.h.b16 %v1251
    %v1331 = vunpack.c.l.b16 %v1252
    %v1332 = vunpack.c.h.b16 %v1252
    %v1333 = vunpack.c.l.b16 %v1253
    %v1334 = vunpack.c.h.b16 %v1253
    %v1335 = vunpack.c.l.b16 %v1254
    %v1336 = vunpack.c.h.b16 %v1254
    %v1337 = vunpack.c.l.b16 %v1255
    %v1338 = vunpack.c.h.b16 %v1255
    %v1339 = vunpack.c.l.b16 %v1256
    %v1340 = vunpack.c.h.b16 %v1256
    %v1341 = vunpack.c.l.b16 %v1257
    %v1342 = vunpack.c.h.b16 %v1257
    %v1343 = vunpack.c.l.b16 %v1258
    %v1344 = vunpack.c.h.b16 %v1258
    %v1345 = vunpack.c.l.b16 %v1259
    %v1346 = vunpack.c.h.b16 %v1259
    %v1347 = vunpack.c.l.b16 %v1260
    %v1348 = vunpack.c.h.b16 %v1260
    %v1349 = vunpack.c.l.b16 %v1261
    %v1350 = vunpack.c.h.b16 %v1261
    %v1351 = vunpack.c.l.b16 %v1262
    %v1352 = vunpack.c.h.b16 %v1262
    %v1353 = vunpack.c.l.b16 %v1263
    %v1354 = vunpack.c.h.b16 %v1263
    %v1355 = vunpack.c.l.b16 %v1264
    %v1356 = vunpack.c.h.b16 %v1264
    %v1357 = vunpack.c.l.b16 %v1265
    %v1358 = vunpack.c.h.b16 %v1265
    %v1359 = vunpack.c.l.b16 %v1266
    %v1360 = vunpack.c.h.b16 %v1266
    %v1361 = vunpack.c.l.b16 %v1267
    %v1362 = vunpack.c.h.b16 %v1267
    %v1363 = vunpack.c.l.b16 %v1268
    %v1364 = vunpack.c.h.b16 %v1268
    %v1365 = vunpack.c.l.b16 %v1269
    %v1366 = vunpack.c.h.b16 %v1269
    %v1367 = vunpack.c.l.b16 %v1270
    %v1368 = vunpack.c.h.b16 %v1270
    %v1369 = vunpack.c.l.b16 %v1271
    %v1370 = vunpack.c.h.b16 %v1271
    %v1371 = vunpack.c.l.b16 %v1272
    %v1372 = vunpack.c.h.b16 %v1272
    %v1373 = vunpack.c.l.b16 %v1273
    %v1374 = vunpack.c.h.b16 %v1273
    %v1375 = vunpack.c.l.b16 %v1274
    %v1376 = vunpack.c.h.b16 %v1274
    %v1377 = vpack.c.b16 %v1315, %v1313
    %v1378 = vpack.c.b16 %v1316, %v1314
    %v1379 = vpack.c.b16 %v1319, %v1317
    %v1380 = vpack.c.b16 %v1320, %v1318
    %v1381 = vpack.c.b16 %v1323, %v1321
    %v1382 = vpack.c.b16 %v1324, %v1322
    %v1383 = vpack.c.b16 %v1327, %v1325
    %v1384 = vpack.c.b16 %v1328, %v1326
    %v1385 = vpack.c.b16 %v1331, %v1329
    %v1386 = vpack.c.b16 %v1332, %v1330
    %v1387 = vpack.c.b16 %v1335, %v1333
    %v1388 = vpack.c.b16 %v1336, %v1334
    %v1389 = vpack.c.b16 %v1339, %v1337
    %v1390 = vpack.c.b16 %v1340, %v1338
    %v1391 = vpack.c.b16 %v1343, %v1341
    %v1392 = vpack.c.b16 %v1344, %v1342
    %v1393 = vpack.c.b16 %v1347, %v1345
    %v1394 = vpack.c.b16 %v1348, %v1346
    %v1395 = vpack.c.b16 %v1351, %v1349
    %v1396 = vpack.c.b16 %v1352, %v1350
    %v1397 = vpack.c.b16 %v1355, %v1353
    %v1398 = vpack.c.b16 %v1356, %v1354
    %v1399 = vpack.c.b16 %v1359, %v1357
    %v1400 = vpack.c.b16 %v1360, %v1358
    %v1401 = vpack.c.b16 %v1363, %v1361
    %v1402 = vpack.c.b16 %v1364, %v1362
    %v1403 = vpack.c.b16 %v1367, %v1365
    %v1404 = vpack.c.b16 %v1368, %v1366
    %v1405 = vpack.c.b16 %v1371, %v1369
    %v1406 = vpack.c.b16 %v1372, %v1370
    %v1407 = vpack.c.b16 %v1375, %v1373
    %v1408 = vpack.c.b16 %v1376, %v1374
    %1441 = vmatpush.bf16.msra.mxu0 %v1391
    %1442 = vmatpush.bf16.msra.mxu0 %v1389
    %1443 = vmatpush.bf16.msra.mxu0 %v1387
    %1444 = vmatpush.bf16.msra.mxu0 %v1385
    %1445 = vmatpush.bf16.msra.mxu0 %v1383
    %1446 = vmatpush.bf16.msra.mxu0 %v1381
    %1447 = vmatpush.bf16.msra.mxu0 %v1379
    %1448 = vmatpush.bf16.msra.mxu0 %v1377
    %1449 = vmatmul.bf16.gmra.mxu0 %v1241
    %v1450 = vpop.f32.mrf.mxu0
    %v1451 = vadd.f32 %v1277, %v1450
    %v1452 = vpop.f32.mrf.mxu0
    %v1453 = vadd.f32 %v1277, %v1452
    %1454 = vdwg.mxu0
    %1455 = vmatpush.bf16.msra.mxu0 %v1407
    %1456 = vmatpush.bf16.msra.mxu0 %v1405
    %1457 = vmatpush.bf16.msra.mxu0 %v1403
    %1458 = vmatpush.bf16.msra.mxu0 %v1401
    %1459 = vmatpush.bf16.msra.mxu0 %v1399
    %1460 = vmatpush.bf16.msra.mxu0 %v1397
    %1461 = vmatpush.bf16.msra.mxu0 %v1395
    %1462 = vmatpush.bf16.msra.mxu0 %v1393
    %1463 = vmatmul.bf16.gmra.mxu0 %v1242
    %v1464 = vpop.f32.mrf.mxu0
    %v1465 = vadd.f32 %v1451, %v1464
    %v1466 = vpop.f32.mrf.mxu0
    %v1467 = vadd.f32 %v1453, %v1466
    %1468 = vdwg.mxu0
    %1469 = vmatpush.bf16.msra.mxu0 %v1392
    %1470 = vmatpush.bf16.msra.mxu0 %v1390
    %1471 = vmatpush.bf16.msra.mxu0 %v1388
    %1472 = vmatpush.bf16.msra.mxu0 %v1386
    %1473 = vmatpush.bf16.msra.mxu0 %v1384
    %1474 = vmatpush.bf16.msra.mxu0 %v1382
    %1475 = vmatpush.bf16.msra.mxu0 %v1380
    %1476 = vmatpush.bf16.msra.mxu0 %v1378
    %1477 = vmatmul.bf16.gmra.mxu0 %v1241
    %v1478 = vpop.f32.mrf.mxu0
    %v1479 = vadd.f32 %v1278, %v1478
    %v1480 = vpop.f32.mrf.mxu0
    %v1481 = vadd.f32 %v1278, %v1480
    %1482 = vdwg.mxu0
    %1483 = vmatpush.bf16.msra.mxu0 %v1408
    %1484 = vmatpush.bf16.msra.mxu0 %v1406
    %1485 = vmatpush.bf16.msra.mxu0 %v1404
    %1486 = vmatpush.bf16.msra.mxu0 %v1402
    %1487 = vmatpush.bf16.msra.mxu0 %v1400
    %1488 = vmatpush.bf16.msra.mxu0 %v1398
    %1489 = vmatpush.bf16.msra.mxu0 %v1396
    %1490 = vmatpush.bf16.msra.mxu0 %v1394
    %1491 = vmatmul.bf16.gmra.mxu0 %v1242
    %v1492 = vpop.f32.mrf.mxu0
    %v1493 = vadd.f32 %v1479, %v1492
    %v1494 = vpop.f32.mrf.mxu0
    %v1495 = vadd.f32 %v1481, %v1494
    %1496 = vdwg.mxu0
    %1497 = vst [vmem:[%s15] sm:$0xff] %v1465
    %1498 = vst [vmem:[%s15 + $0x8] sm:$0xff] %v1493
    %1499 = vst [vmem:[%s15 + $0x10] sm:$0xff] %v1467
    %1500 = vst [vmem:[%s15 + $0x18] sm:$0xff] %v1495
    %v1501 = vmul.f32 %v1493, 1.442695
    %v1502 = vpow.pop %v1501
    %v1503 = vmul.f32 %v1495, 1.442695
    %v1504 = vpow.pop %v1503
    %v1505 = vmul.f32 %v181, %v1502
    %v1506 = vmul.f32 %v182, %v1504
    %v1507 = vadd.f32 %v1465, %v1505
    %v1508 = vadd.f32 %v1467, %v1506
    %v1509 = vpack.c.bf16 %v1508, %v1507
    %v1510 = vld [vmem:[#allocation10] sm:$0xff]
    %v1511 = vld [vmem:[#allocation10 + $0x8] sm:$0xff]
    %v1512 = vld [vmem:[#allocation10 + $0x10] sm:$0xff]
    %v1513 = vld [vmem:[#allocation10 + $0x18] sm:$0xff]
    %v1514 = vld [vmem:[#allocation10 + $0x20] sm:$0xff]
    %v1515 = vld [vmem:[#allocation10 + $0x28] sm:$0xff]
    %v1516 = vld [vmem:[#allocation10 + $0x30] sm:$0xff]
    %v1517 = vld [vmem:[#allocation10 + $0x38] sm:$0xff]
    %v1518 = vld [vmem:[#allocation10 + $0x40] sm:$0xff]
    %v1519 = vld [vmem:[#allocation10 + $0x48] sm:$0xff]
    %v1520 = vld [vmem:[#allocation10 + $0x50] sm:$0xff]
    %v1521 = vld [vmem:[#allocation10 + $0x58] sm:$0xff]
    %v1522 = vld [vmem:[#allocation10 + $0x60] sm:$0xff]
    %v1523 = vld [vmem:[#allocation10 + $0x68] sm:$0xff]
    %v1524 = vld [vmem:[#allocation10 + $0x70] sm:$0xff]
    %v1525 = vld [vmem:[#allocation10 + $0x78] sm:$0xff]
    %v1526 = vld [vmem:[%s9] sm:$0x3]
    %v1528 = vperm.slane %v1526, 0
    %v1529 = vperm.slane %v1526, 1
    %v1548 = vunpack.c.l.b16 %v1510
    %v1549 = vunpack.c.h.b16 %v1510
    %v1550 = vunpack.c.l.b16 %v1511
    %v1551 = vunpack.c.h.b16 %v1511
    %v1552 = vunpack.c.l.b16 %v1512
    %v1553 = vunpack.c.h.b16 %v1512
    %v1554 = vunpack.c.l.b16 %v1513
    %v1555 = vunpack.c.h.b16 %v1513
    %v1556 = vunpack.c.l.b16 %v1514
    %v1557 = vunpack.c.h.b16 %v1514
    %v1558 = vunpack.c.l.b16 %v1515
    %v1559 = vunpack.c.h.b16 %v1515
    %v1560 = vunpack.c.l.b16 %v1516
    %v1561 = vunpack.c.h.b16 %v1516
    %v1562 = vunpack.c.l.b16 %v1517
    %v1563 = vunpack.c.h.b16 %v1517
    %v1564 = vunpack.c.l.b16 %v1518
    %v1565 = vunpack.c.h.b16 %v1518
    %v1566 = vunpack.c.l.b16 %v1519
    %v1567 = vunpack.c.h.b16 %v1519
    %v1568 = vunpack.c.l.b16 %v1520
    %v1569 = vunpack.c.h.b16 %v1520
    %v1570 = vunpack.c.l.b16 %v1521
    %v1571 = vunpack.c.h.b16 %v1521
    %v1572 = vunpack.c.l.b16 %v1522
    %v1573 = vunpack.c.h.b16 %v1522
    %v1574 = vunpack.c.l.b16 %v1523
    %v1575 = vunpack.c.h.b16 %v1523
    %v1576 = vunpack.c.l.b16 %v1524
    %v1577 = vunpack.c.h.b16 %v1524
    %v1578 = vunpack.c.l.b16 %v1525
    %v1579 = vunpack.c.h.b16 %v1525
    %v1580 = vpack.c.b16 %v1550, %v1548
    %v1581 = vpack.c.b16 %v1551, %v1549
    %v1582 = vpack.c.b16 %v1554, %v1552
    %v1583 = vpack.c.b16 %v1555, %v1553
    %v1584 = vpack.c.b16 %v1558, %v1556
    %v1585 = vpack.c.b16 %v1559, %v1557
    %v1586 = vpack.c.b16 %v1562, %v1560
    %v1587 = vpack.c.b16 %v1563, %v1561
    %v1588 = vpack.c.b16 %v1566, %v1564
    %v1589 = vpack.c.b16 %v1567, %v1565
    %v1590 = vpack.c.b16 %v1570, %v1568
    %v1591 = vpack.c.b16 %v1571, %v1569
    %v1592 = vpack.c.b16 %v1574, %v1572
    %v1593 = vpack.c.b16 %v1575, %v1573
    %v1594 = vpack.c.b16 %v1578, %v1576
    %v1595 = vpack.c.b16 %v1579, %v1577
    %1612 = vmatpush.bf16.msra.mxu0 %v1594
    %1613 = vmatpush.bf16.msra.mxu0 %v1592
    %1614 = vmatpush.bf16.msra.mxu0 %v1590
    %1615 = vmatpush.bf16.msra.mxu0 %v1588
    %1616 = vmatpush.bf16.msra.mxu0 %v1586
    %1617 = vmatpush.bf16.msra.mxu0 %v1584
    %1618 = vmatpush.bf16.msra.mxu0 %v1582
    %1619 = vmatpush.bf16.msra.mxu0 %v1580
    %1620 = vmatmul.bf16.gmra.mxu0 %v1509
    %v1621 = vpop.f32.mrf.mxu0
    %v1622 = vadd.f32 %v1528, %v1621
    %v1623 = vpop.f32.mrf.mxu0
    %v1624 = vadd.f32 %v1528, %v1623
    %1625 = vdwg.mxu0
    %1626 = vmatpush.bf16.msra.mxu0 %v1595
    %1627 = vmatpush.bf16.msra.mxu0 %v1593
    %1628 = vmatpush.bf16.msra.mxu0 %v1591
    %1629 = vmatpush.bf16.msra.mxu0 %v1589
    %1630 = vmatpush.bf16.msra.mxu0 %v1587
    %1631 = vmatpush.bf16.msra.mxu0 %v1585
    %1632 = vmatpush.bf16.msra.mxu0 %v1583
    %1633 = vmatpush.bf16.msra.mxu0 %v1581
    %1634 = vmatmul.bf16.gmra.mxu0 %v1509
    %v1635 = vpop.f32.mrf.mxu0
    %v1636 = vadd.f32 %v1529, %v1635
    %v1637 = vpop.f32.mrf.mxu0
    %v1638 = vadd.f32 %v1529, %v1637
    %1639 = vdwg.mxu0
    %v1640 = vtanh.pop %v1622
    %v1641 = vtanh.pop %v1636
    %v1642 = vtanh.pop %v1624
    %v1643 = vtanh.pop %v1638
    %v1644 = vpack.c.bf16 %v1642, %v1640
    %v1645 = vpack.c.bf16 %v1643, %v1641
    %v1646 = vld [vmem:[#allocation11] sm:$0xff]
    %v1647 = vld [vmem:[#allocation11 + $0x8] sm:$0xff]
    %v1648 = vld [vmem:[#allocation11 + $0x10] sm:$0xff]
    %v1649 = vld [vmem:[#allocation11 + $0x18] sm:$0xff]
    %v1650 = vld [vmem:[#allocation11 + $0x20] sm:$0xff]
    %v1651 = vld [vmem:[#allocation11 + $0x28] sm:$0xff]
    %v1652 = vld [vmem:[#allocation11 + $0x30] sm:$0xff]
    %v1653 = vld [vmem:[#allocation11 + $0x38] sm:$0xff]
    %v1654 = vld [vmem:[#allocation11 + $0x40] sm:$0xff]
    %v1655 = vld [vmem:[#allocation11 + $0x48] sm:$0xff]
    %v1656 = vld [vmem:[#allocation11 + $0x50] sm:$0xff]
    %v1657 = vld [vmem:[#allocation11 + $0x58] sm:$0xff]
    %v1658 = vld [vmem:[#allocation11 + $0x60] sm:$0xff]
    %v1659 = vld [vmem:[#allocation11 + $0x68] sm:$0xff]
    %v1660 = vld [vmem:[#allocation11 + $0x70] sm:$0xff]
    %v1661 = vld [vmem:[#allocation11 + $0x78] sm:$0xff]
    %v1662 = vld [vmem:[#allocation11 + $0x80] sm:$0xff]
    %v1663 = vld [vmem:[#allocation11 + $0x88] sm:$0xff]
    %v1664 = vld [vmem:[#allocation11 + $0x90] sm:$0xff]
    %v1665 = vld [vmem:[#allocation11 + $0x98] sm:$0xff]
    %v1666 = vld [vmem:[#allocation11 + $0xa0] sm:$0xff]
    %v1667 = vld [vmem:[#allocation11 + $0xa8] sm:$0xff]
    %v1668 = vld [vmem:[#allocation11 + $0xb0] sm:$0xff]
    %v1669 = vld [vmem:[#allocation11 + $0xb8] sm:$0xff]
    %v1670 = vld [vmem:[#allocation11 + $0xc0] sm:$0xff]
    %v1671 = vld [vmem:[#allocation11 + $0xc8] sm:$0xff]
    %v1672 = vld [vmem:[#allocation11 + $0xd0] sm:$0xff]
    %v1673 = vld [vmem:[#allocation11 + $0xd8] sm:$0xff]
    %v1674 = vld [vmem:[#allocation11 + $0xe0] sm:$0xff]
    %v1675 = vld [vmem:[#allocation11 + $0xe8] sm:$0xff]
    %v1676 = vld [vmem:[#allocation11 + $0xf0] sm:$0xff]
    %v1677 = vld [vmem:[#allocation11 + $0xf8] sm:$0xff]
    %v1678 = vld [vmem:[%s11] sm:$0x3]
    %v1680 = vperm.slane %v1678, 0
    %v1681 = vperm.slane %v1678, 1
    %v1716 = vunpack.c.l.b16 %v1646
    %v1717 = vunpack.c.h.b16 %v1646
    %v1718 = vunpack.c.l.b16 %v1647
    %v1719 = vunpack.c.h.b16 %v1647
    %v1720 = vunpack.c.l.b16 %v1648
    %v1721 = vunpack.c.h.b16 %v1648
    %v1722 = vunpack.c.l.b16 %v1649
    %v1723 = vunpack.c.h.b16 %v1649
    %v1724 = vunpack.c.l.b16 %v1650
    %v1725 = vunpack.c.h.b16 %v1650
    %v1726 = vunpack.c.l.b16 %v1651
    %v1727 = vunpack.c.h.b16 %v1651
    %v1728 = vunpack.c.l.b16 %v1652
    %v1729 = vunpack.c.h.b16 %v1652
    %v1730 = vunpack.c.l.b16 %v1653
    %v1731 = vunpack.c.h.b16 %v1653
    %v1732 = vunpack.c.l.b16 %v1654
    %v1733 = vunpack.c.h.b16 %v1654
    %v1734 = vunpack.c.l.b16 %v1655
    %v1735 = vunpack.c.h.b16 %v1655
    %v1736 = vunpack.c.l.b16 %v1656
    %v1737 = vunpack.c.h.b16 %v1656
    %v1738 = vunpack.c.l.b16 %v1657
    %v1739 = vunpack.c.h.b16 %v1657
    %v1740 = vunpack.c.l.b16 %v1658
    %v1741 = vunpack.c.h.b16 %v1658
    %v1742 = vunpack.c.l.b16 %v1659
    %v1743 = vunpack.c.h.b16 %v1659
    %v1744 = vunpack.c.l.b16 %v1660
    %v1745 = vunpack.c.h.b16 %v1660
    %v1746 = vunpack.c.l.b16 %v1661
    %v1747 = vunpack.c.h.b16 %v1661
    %v1748 = vunpack.c.l.b16 %v1662
    %v1749 = vunpack.c.h.b16 %v1662
    %v1750 = vunpack.c.l.b16 %v1663
    %v1751 = vunpack.c.h.b16 %v1663
    %v1752 = vunpack.c.l.b16 %v1664
    %v1753 = vunpack.c.h.b16 %v1664
    %v1754 = vunpack.c.l.b16 %v1665
    %v1755 = vunpack.c.h.b16 %v1665
    %v1756 = vunpack.c.l.b16 %v1666
    %v1757 = vunpack.c.h.b16 %v1666
    %v1758 = vunpack.c.l.b16 %v1667
    %v1759 = vunpack.c.h.b16 %v1667
    %v1760 = vunpack.c.l.b16 %v1668
    %v1761 = vunpack.c.h.b16 %v1668
    %v1762 = vunpack.c.l.b16 %v1669
    %v1763 = vunpack.c.h.b16 %v1669
    %v1764 = vunpack.c.l.b16 %v1670
    %v1765 = vunpack.c.h.b16 %v1670
    %v1766 = vunpack.c.l.b16 %v1671
    %v1767 = vunpack.c.h.b16 %v1671
    %v1768 = vunpack.c.l.b16 %v1672
    %v1769 = vunpack.c.h.b16 %v1672
    %v1770 = vunpack.c.l.b16 %v1673
    %v1771 = vunpack.c.h.b16 %v1673
    %v1772 = vunpack.c.l.b16 %v1674
    %v1773 = vunpack.c.h.b16 %v1674
    %v1774 = vunpack.c.l.b16 %v1675
    %v1775 = vunpack.c.h.b16 %v1675
    %v1776 = vunpack.c.l.b16 %v1676
    %v1777 = vunpack.c.h.b16 %v1676
    %v1778 = vunpack.c.l.b16 %v1677
    %v1779 = vunpack.c.h.b16 %v1677
    %v1780 = vpack.c.b16 %v1718, %v1716
    %v1781 = vpack.c.b16 %v1719, %v1717
    %v1782 = vpack.c.b16 %v1722, %v1720
    %v1783 = vpack.c.b16 %v1723, %v1721
    %v1784 = vpack.c.b16 %v1726, %v1724
    %v1785 = vpack.c.b16 %v1727, %v1725
    %v1786 = vpack.c.b16 %v1730, %v1728
    %v1787 = vpack.c.b16 %v1731, %v1729
    %v1788 = vpack.c.b16 %v1734, %v1732
    %v1789 = vpack.c.b16 %v1735, %v1733
    %v1790 = vpack.c.b16 %v1738, %v1736
    %v1791 = vpack.c.b16 %v1739, %v1737
    %v1792 = vpack.c.b16 %v1742, %v1740
    %v1793 = vpack.c.b16 %v1743, %v1741
    %v1794 = vpack.c.b16 %v1746, %v1744
    %v1795 = vpack.c.b16 %v1747, %v1745
    %v1796 = vpack.c.b16 %v1750, %v1748
    %v1797 = vpack.c.b16 %v1751, %v1749
    %v1798 = vpack.c.b16 %v1754, %v1752
    %v1799 = vpack.c.b16 %v1755, %v1753
    %v1800 = vpack.c.b16 %v1758, %v1756
    %v1801 = vpack.c.b16 %v1759, %v1757
    %v1802 = vpack.c.b16 %v1762, %v1760
    %v1803 = vpack.c.b16 %v1763, %v1761
    %v1804 = vpack.c.b16 %v1766, %v1764
    %v1805 = vpack.c.b16 %v1767, %v1765
    %v1806 = vpack.c.b16 %v1770, %v1768
    %v1807 = vpack.c.b16 %v1771, %v1769
    %v1808 = vpack.c.b16 %v1774, %v1772
    %v1809 = vpack.c.b16 %v1775, %v1773
    %v1810 = vpack.c.b16 %v1778, %v1776
    %v1811 = vpack.c.b16 %v1779, %v1777
    %1844 = vmatpush.bf16.msra.mxu0 %v1794
    %1845 = vmatpush.bf16.msra.mxu0 %v1792
    %1846 = vmatpush.bf16.msra.mxu0 %v1790
    %1847 = vmatpush.bf16.msra.mxu0 %v1788
    %1848 = vmatpush.bf16.msra.mxu0 %v1786
    %1849 = vmatpush.bf16.msra.mxu0 %v1784
    %1850 = vmatpush.bf16.msra.mxu0 %v1782
    %1851 = vmatpush.bf16.msra.mxu0 %v1780
    %1852 = vmatmul.bf16.gmra.mxu0 %v1644
    %v1853 = vpop.f32.mrf.mxu0
    %v1854 = vadd.f32 %v1680, %v1853
    %v1855 = vpop.f32.mrf.mxu0
    %v1856 = vadd.f32 %v1680, %v1855
    %1857 = vdwg.mxu0
    %1858 = vmatpush.bf16.msra.mxu0 %v1810
    %1859 = vmatpush.bf16.msra.mxu0 %v1808
    %1860 = vmatpush.bf16.msra.mxu0 %v1806
    %1861 = vmatpush.bf16.msra.mxu0 %v1804
    %1862 = vmatpush.bf16.msra.mxu0 %v1802
    %1863 = vmatpush.bf16.msra.mxu0 %v1800
    %1864 = vmatpush.bf16.msra.mxu0 %v1798
    %1865 = vmatpush.bf16.msra.mxu0 %v1796
    %1866 = vmatmul.bf16.gmra.mxu0 %v1645
    %v1867 = vpop.f32.mrf.mxu0
    %v1868 = vadd.f32 %v1854, %v1867
    %v1869 = vpop.f32.mrf.mxu0
    %v1870 = vadd.f32 %v1856, %v1869
    %1871 = vdwg.mxu0
    %1872 = vmatpush.bf16.msra.mxu0 %v1795
    %1873 = vmatpush.bf16.msra.mxu0 %v1793
    %1874 = vmatpush.bf16.msra.mxu0 %v1791
    %1875 = vmatpush.bf16.msra.mxu0 %v1789
    %1876 = vmatpush.bf16.msra.mxu0 %v1787
    %1877 = vmatpush.bf16.msra.mxu0 %v1785
    %1878 = vmatpush.bf16.msra.mxu0 %v1783
    %1879 = vmatpush.bf16.msra.mxu0 %v1781
    %1880 = vmatmul.bf16.gmra.mxu0 %v1644
    %v1881 = vpop.f32.mrf.mxu0
    %v1882 = vadd.f32 %v1681, %v1881
    %v1883 = vpop.f32.mrf.mxu0
    %v1884 = vadd.f32 %v1681, %v1883
    %1885 = vdwg.mxu0
    %1886 = vmatpush.bf16.msra.mxu0 %v1811
    %1887 = vmatpush.bf16.msra.mxu0 %v1809
    %1888 = vmatpush.bf16.msra.mxu0 %v1807
    %1889 = vmatpush.bf16.msra.mxu0 %v1805
    %1890 = vmatpush.bf16.msra.mxu0 %v1803
    %1891 = vmatpush.bf16.msra.mxu0 %v1801
    %1892 = vmatpush.bf16.msra.mxu0 %v1799
    %1893 = vmatpush.bf16.msra.mxu0 %v1797
    %1894 = vmatmul.bf16.gmra.mxu0 %v1645
    %v1895 = vpop.f32.mrf.mxu0
    %v1896 = vadd.f32 %v1882, %v1895
    %v1897 = vpop.f32.mrf.mxu0
    %v1898 = vadd.f32 %v1884, %v1897
    %1899 = vdwg.mxu0
    %v1900 = vtanh.pop %v1868
    %v1901 = vtanh.pop %v1896
    %v1902 = vtanh.pop %v1870
    %v1903 = vtanh.pop %v1898
    %v1904 = vpack.c.bf16 %v1902, %v1900
    %v1905 = vpack.c.bf16 %v1903, %v1901
    %v1906 = vld [vmem:[#allocation13] sm:$0xff]
    %v1907 = vld [vmem:[#allocation13 + $0x8] sm:$0xff]
    %v1908 = vld [vmem:[#allocation13 + $0x10] sm:$0xff]
    %v1909 = vld [vmem:[#allocation13 + $0x18] sm:$0xf]
    %v1910 = vld [vmem:[#allocation13 + $0x1c] sm:$0xff]
    %v1911 = vld [vmem:[#allocation13 + $0x24] sm:$0xff]
    %v1912 = vld [vmem:[#allocation13 + $0x2c] sm:$0xff]
    %v1913 = vld [vmem:[#allocation13 + $0x34] sm:$0xf]
    %v1914 = vld [vmem:[#allocation13 + $0x38] sm:$0xff]
    %v1915 = vld [vmem:[#allocation13 + $0x40] sm:$0xff]
    %v1916 = vld [vmem:[#allocation13 + $0x48] sm:$0xff]
    %v1917 = vld [vmem:[#allocation13 + $0x50] sm:$0xf]
    %v1918 = vld [vmem:[#allocation13 + $0x54] sm:$0xff]
    %v1919 = vld [vmem:[#allocation13 + $0x5c] sm:$0xff]
    %v1920 = vld [vmem:[#allocation13 + $0x64] sm:$0xff]
    %v1921 = vld [vmem:[#allocation13 + $0x6c] sm:$0xf]
    %v1922 = vld [vmem:[#allocation13 + $0x70] sm:$0xff]
    %v1923 = vld [vmem:[#allocation13 + $0x78] sm:$0xff]
    %v1924 = vld [vmem:[#allocation13 + $0x80] sm:$0xff]
    %v1925 = vld [vmem:[#allocation13 + $0x88] sm:$0xf]
    %v1926 = vld [vmem:[#allocation13 + $0x8c] sm:$0xff]
    %v1927 = vld [vmem:[#allocation13 + $0x94] sm:$0xff]
    %v1928 = vld [vmem:[#allocation13 + $0x9c] sm:$0xff]
    %v1929 = vld [vmem:[#allocation13 + $0xa4] sm:$0xf]
    %v1930 = vld [vmem:[#allocation13 + $0xa8] sm:$0xff]
    %v1931 = vld [vmem:[#allocation13 + $0xb0] sm:$0xff]
    %v1932 = vld [vmem:[#allocation13 + $0xb8] sm:$0xff]
    %v1933 = vld [vmem:[#allocation13 + $0xc0] sm:$0xf]
    %v1934 = vld [vmem:[#allocation13 + $0xc4] sm:$0xff]
    %v1935 = vld [vmem:[#allocation13 + $0xcc] sm:$0xff]
    %v1936 = vld [vmem:[#allocation13 + $0xd4] sm:$0xff]
    %v1937 = vld [vmem:[#allocation13 + $0xdc] sm:$0xf]
    %v1938 = vld [vmem:[#allocation13 + $0xe0] sm:$0xff]
    %v1939 = vld [vmem:[#allocation13 + $0xe8] sm:$0xff]
    %v1940 = vld [vmem:[#allocation13 + $0xf0] sm:$0xff]
    %v1941 = vld [vmem:[#allocation13 + $0xf8] sm:$0xf]
    %v1942 = vld [vmem:[#allocation13 + $0xfc] sm:$0xff]
    %v1943 = vld [vmem:[#allocation13 + $0x104] sm:$0xff]
    %v1944 = vld [vmem:[#allocation13 + $0x10c] sm:$0xff]
    %v1945 = vld [vmem:[#allocation13 + $0x114] sm:$0xf]
    %v1946 = vld [vmem:[#allocation13 + $0x118] sm:$0xff]
    %v1947 = vld [vmem:[#allocation13 + $0x120] sm:$0xff]
    %v1948 = vld [vmem:[#allocation13 + $0x128] sm:$0xff]
    %v1949 = vld [vmem:[#allocation13 + $0x130] sm:$0xf]
    %v1950 = vld [vmem:[#allocation13 + $0x134] sm:$0xff]
    %v1951 = vld [vmem:[#allocation13 + $0x13c] sm:$0xff]
    %v1952 = vld [vmem:[#allocation13 + $0x144] sm:$0xff]
    %v1953 = vld [vmem:[#allocation13 + $0x14c] sm:$0xf]
    %v1954 = vld [vmem:[#allocation13 + $0x150] sm:$0xff]
    %v1955 = vld [vmem:[#allocation13 + $0x158] sm:$0xff]
    %v1956 = vld [vmem:[#allocation13 + $0x160] sm:$0xff]
    %v1957 = vld [vmem:[#allocation13 + $0x168] sm:$0xf]
    %v1958 = vld [vmem:[#allocation13 + $0x16c] sm:$0xff]
    %v1959 = vld [vmem:[#allocation13 + $0x174] sm:$0xff]
    %v1960 = vld [vmem:[#allocation13 + $0x17c] sm:$0xff]
    %v1961 = vld [vmem:[#allocation13 + $0x184] sm:$0xf]
    %v1962 = vld [vmem:[#allocation13 + $0x188] sm:$0xff]
    %v1963 = vld [vmem:[#allocation13 + $0x190] sm:$0xff]
    %v1964 = vld [vmem:[#allocation13 + $0x198] sm:$0xff]
    %v1965 = vld [vmem:[#allocation13 + $0x1a0] sm:$0xf]
    %v1966 = vld [vmem:[#allocation13 + $0x1a4] sm:$0xff]
    %v1967 = vld [vmem:[#allocation13 + $0x1ac] sm:$0xff]
    %v1968 = vld [vmem:[#allocation13 + $0x1b4] sm:$0xff]
    %v1969 = vld [vmem:[#allocation13 + $0x1bc] sm:$0xf]
    %v1970 = vld [vmem:[#allocation13 + $0x1c0] sm:$0xff]
    %v1971 = vld [vmem:[#allocation13 + $0x1c8] sm:$0xff]
    %v1972 = vld [vmem:[#allocation13 + $0x1d0] sm:$0xff]
    %v1973 = vld [vmem:[#allocation13 + $0x1d8] sm:$0xf]
    %v1974 = vld [vmem:[#allocation13 + $0x1dc] sm:$0xff]
    %v1975 = vld [vmem:[#allocation13 + $0x1e4] sm:$0xff]
    %v1976 = vld [vmem:[#allocation13 + $0x1ec] sm:$0xff]
    %v1977 = vld [vmem:[#allocation13 + $0x1f4] sm:$0xf]
    %v1978 = vld [vmem:[#allocation13 + $0x1f8] sm:$0xff]
    %v1979 = vld [vmem:[#allocation13 + $0x200] sm:$0xff]
    %v1980 = vld [vmem:[#allocation13 + $0x208] sm:$0xff]
    %v1981 = vld [vmem:[#allocation13 + $0x210] sm:$0xf]
    %v1982 = vld [vmem:[#allocation13 + $0x214] sm:$0xff]
    %v1983 = vld [vmem:[#allocation13 + $0x21c] sm:$0xff]
    %v1984 = vld [vmem:[#allocation13 + $0x224] sm:$0xff]
    %v1985 = vld [vmem:[#allocation13 + $0x22c] sm:$0xf]
    %v1986 = vld [vmem:[#allocation13 + $0x230] sm:$0xff]
    %v1987 = vld [vmem:[#allocation13 + $0x238] sm:$0xff]
    %v1988 = vld [vmem:[#allocation13 + $0x240] sm:$0xff]
    %v1989 = vld [vmem:[#allocation13 + $0x248] sm:$0xf]
    %v1990 = vld [vmem:[#allocation13 + $0x24c] sm:$0xff]
    %v1991 = vld [vmem:[#allocation13 + $0x254] sm:$0xff]
    %v1992 = vld [vmem:[#allocation13 + $0x25c] sm:$0xff]
    %v1993 = vld [vmem:[#allocation13 + $0x264] sm:$0xf]
    %v1994 = vld [vmem:[#allocation13 + $0x268] sm:$0xff]
    %v1995 = vld [vmem:[#allocation13 + $0x270] sm:$0xff]
    %v1996 = vld [vmem:[#allocation13 + $0x278] sm:$0xff]
    %v1997 = vld [vmem:[#allocation13 + $0x280] sm:$0xf]
    %v1998 = vld [vmem:[#allocation13 + $0x284] sm:$0xff]
    %v1999 = vld [vmem:[#allocation13 + $0x28c] sm:$0xff]
    %v2000 = vld [vmem:[#allocation13 + $0x294] sm:$0xff]
    %v2001 = vld [vmem:[#allocation13 + $0x29c] sm:$0xf]
    %v2002 = vld [vmem:[#allocation13 + $0x2a0] sm:$0xff]
    %v2003 = vld [vmem:[#allocation13 + $0x2a8] sm:$0xff]
    %v2004 = vld [vmem:[#allocation13 + $0x2b0] sm:$0xff]
    %v2005 = vld [vmem:[#allocation13 + $0x2b8] sm:$0xf]
    %v2006 = vld [vmem:[#allocation13 + $0x2bc] sm:$0xff]
    %v2007 = vld [vmem:[#allocation13 + $0x2c4] sm:$0xff]
    %v2008 = vld [vmem:[#allocation13 + $0x2cc] sm:$0xff]
    %v2009 = vld [vmem:[#allocation13 + $0x2d4] sm:$0xf]
    %v2010 = vld [vmem:[#allocation13 + $0x2d8] sm:$0xff]
    %v2011 = vld [vmem:[#allocation13 + $0x2e0] sm:$0xff]
    %v2012 = vld [vmem:[#allocation13 + $0x2e8] sm:$0xff]
    %v2013 = vld [vmem:[#allocation13 + $0x2f0] sm:$0xf]
    %v2014 = vld [vmem:[#allocation13 + $0x2f4] sm:$0xff]
    %v2015 = vld [vmem:[#allocation13 + $0x2fc] sm:$0xff]
    %v2016 = vld [vmem:[#allocation13 + $0x304] sm:$0xff]
    %v2017 = vld [vmem:[#allocation13 + $0x30c] sm:$0xf]
    %v2018 = vld [vmem:[#allocation13 + $0x310] sm:$0xff]
    %v2019 = vld [vmem:[#allocation13 + $0x318] sm:$0xff]
    %v2020 = vld [vmem:[#allocation13 + $0x320] sm:$0xff]
    %v2021 = vld [vmem:[#allocation13 + $0x328] sm:$0xf]
    %v2022 = vld [vmem:[#allocation13 + $0x32c] sm:$0xff]
    %v2023 = vld [vmem:[#allocation13 + $0x334] sm:$0xff]
    %v2024 = vld [vmem:[#allocation13 + $0x33c] sm:$0xff]
    %v2025 = vld [vmem:[#allocation13 + $0x344] sm:$0xf]
    %v2026 = vld [vmem:[#allocation13 + $0x348] sm:$0xff]
    %v2027 = vld [vmem:[#allocation13 + $0x350] sm:$0xff]
    %v2028 = vld [vmem:[#allocation13 + $0x358] sm:$0xff]
    %v2029 = vld [vmem:[#allocation13 + $0x360] sm:$0xf]
    %v2030 = vld [vmem:[#allocation13 + $0x364] sm:$0xff]
    %v2031 = vld [vmem:[#allocation13 + $0x36c] sm:$0xff]
    %v2032 = vld [vmem:[#allocation13 + $0x374] sm:$0xff]
    %v2033 = vld [vmem:[#allocation13 + $0x37c] sm:$0xf]
    %v2034 = vld [vmem:[%s13] sm:$0x7f]
    %v2036 = vperm.slane %v2034, 0
    %v2037 = vperm.slane %v2034, 1
    %v2038 = vperm.slane %v2034, 2
    %v2039 = vperm.slane %v2034, 3
    %v2040 = vperm.slane %v2034, 4
    %v2041 = vperm.slane %v2034, 5
    %v2042 = vperm.slane %v2034, 6
    %v2178 = vunpack.c.l.b16 %v1906
    %v2179 = vunpack.c.h.b16 %v1906
    %v2180 = vunpack.c.l.b16 %v1907
    %v2181 = vunpack.c.h.b16 %v1907
    %v2182 = vunpack.c.l.b16 %v1908
    %v2183 = vunpack.c.h.b16 %v1908
    %v2184 = vunpack.c.l.b16 %v1909
    %v2185 = vunpack.c.l.b16 %v1910
    %v2186 = vunpack.c.h.b16 %v1910
    %v2187 = vunpack.c.l.b16 %v1911
    %v2188 = vunpack.c.h.b16 %v1911
    %v2189 = vunpack.c.l.b16 %v1912
    %v2190 = vunpack.c.h.b16 %v1912
    %v2191 = vunpack.c.l.b16 %v1913
    %v2192 = vunpack.c.l.b16 %v1914
    %v2193 = vunpack.c.h.b16 %v1914
    %v2194 = vunpack.c.l.b16 %v1915
    %v2195 = vunpack.c.h.b16 %v1915
    %v2196 = vunpack.c.l.b16 %v1916
    %v2197 = vunpack.c.h.b16 %v1916
    %v2198 = vunpack.c.l.b16 %v1917
    %v2199 = vunpack.c.l.b16 %v1918
    %v2200 = vunpack.c.h.b16 %v1918
    %v2201 = vunpack.c.l.b16 %v1919
    %v2202 = vunpack.c.h.b16 %v1919
    %v2203 = vunpack.c.l.b16 %v1920
    %v2204 = vunpack.c.h.b16 %v1920
    %v2205 = vunpack.c.l.b16 %v1921
    %v2206 = vunpack.c.l.b16 %v1922
    %v2207 = vunpack.c.h.b16 %v1922
    %v2208 = vunpack.c.l.b16 %v1923
    %v2209 = vunpack.c.h.b16 %v1923
    %v2210 = vunpack.c.l.b16 %v1924
    %v2211 = vunpack.c.h.b16 %v1924
    %v2212 = vunpack.c.l.b16 %v1925
    %v2213 = vunpack.c.l.b16 %v1926
    %v2214 = vunpack.c.h.b16 %v1926
    %v2215 = vunpack.c.l.b16 %v1927
    %v2216 = vunpack.c.h.b16 %v1927
    %v2217 = vunpack.c.l.b16 %v1928
    %v2218 = vunpack.c.h.b16 %v1928
    %v2219 = vunpack.c.l.b16 %v1929
    %v2220 = vunpack.c.l.b16 %v1930
    %v2221 = vunpack.c.h.b16 %v1930
    %v2222 = vunpack.c.l.b16 %v1931
    %v2223 = vunpack.c.h.b16 %v1931
    %v2224 = vunpack.c.l.b16 %v1932
    %v2225 = vunpack.c.h.b16 %v1932
    %v2226 = vunpack.c.l.b16 %v1933
    %v2227 = vunpack.c.l.b16 %v1934
    %v2228 = vunpack.c.h.b16 %v1934
    %v2229 = vunpack.c.l.b16 %v1935
    %v2230 = vunpack.c.h.b16 %v1935
    %v2231 = vunpack.c.l.b16 %v1936
    %v2232 = vunpack.c.h.b16 %v1936
    %v2233 = vunpack.c.l.b16 %v1937
    %v2234 = vunpack.c.l.b16 %v1938
    %v2235 = vunpack.c.h.b16 %v1938
    %v2236 = vunpack.c.l.b16 %v1939
    %v2237 = vunpack.c.h.b16 %v1939
    %v2238 = vunpack.c.l.b16 %v1940
    %v2239 = vunpack.c.h.b16 %v1940
    %v2240 = vunpack.c.l.b16 %v1941
    %v2241 = vunpack.c.l.b16 %v1942
    %v2242 = vunpack.c.h.b16 %v1942
    %v2243 = vunpack.c.l.b16 %v1943
    %v2244 = vunpack.c.h.b16 %v1943
    %v2245 = vunpack.c.l.b16 %v1944
    %v2246 = vunpack.c.h.b16 %v1944
    %v2247 = vunpack.c.l.b16 %v1945
    %v2248 = vunpack.c.l.b16 %v1946
    %v2249 = vunpack.c.h.b16 %v1946
    %v2250 = vunpack.c.l.b16 %v1947
    %v2251 = vunpack.c.h.b16 %v1947
    %v2252 = vunpack.c.l.b16 %v1948
    %v2253 = vunpack.c.h.b16 %v1948
    %v2254 = vunpack.c.l.b16 %v1949
    %v2255 = vunpack.c.l.b16 %v1950
    %v2256 = vunpack.c.h.b16 %v1950
    %v2257 = vunpack.c.l.b16 %v1951
    %v2258 = vunpack.c.h.b16 %v1951
    %v2259 = vunpack.c.l.b16 %v1952
    %v2260 = vunpack.c.h.b16 %v1952
    %v2261 = vunpack.c.l.b16 %v1953
    %v2262 = vunpack.c.l.b16 %v1954
    %v2263 = vunpack.c.h.b16 %v1954
    %v2264 = vunpack.c.l.b16 %v1955
    %v2265 = vunpack.c.h.b16 %v1955
    %v2266 = vunpack.c.l.b16 %v1956
    %v2267 = vunpack.c.h.b16 %v1956
    %v2268 = vunpack.c.l.b16 %v1957
    %v2269 = vunpack.c.l.b16 %v1958
    %v2270 = vunpack.c.h.b16 %v1958
    %v2271 = vunpack.c.l.b16 %v1959
    %v2272 = vunpack.c.h.b16 %v1959
    %v2273 = vunpack.c.l.b16 %v1960
    %v2274 = vunpack.c.h.b16 %v1960
    %v2275 = vunpack.c.l.b16 %v1961
    %v2276 = vunpack.c.l.b16 %v1962
    %v2277 = vunpack.c.h.b16 %v1962
    %v2278 = vunpack.c.l.b16 %v1963
    %v2279 = vunpack.c.h.b16 %v1963
    %v2280 = vunpack.c.l.b16 %v1964
    %v2281 = vunpack.c.h.b16 %v1964
    %v2282 = vunpack.c.l.b16 %v1965
    %v2283 = vunpack.c.l.b16 %v1966
    %v2284 = vunpack.c.h.b16 %v1966
    %v2285 = vunpack.c.l.b16 %v1967
    %v2286 = vunpack.c.h.b16 %v1967
    %v2287 = vunpack.c.l.b16 %v1968
    %v2288 = vunpack.c.h.b16 %v1968
    %v2289 = vunpack.c.l.b16 %v1969
    %v2290 = vunpack.c.l.b16 %v1970
    %v2291 = vunpack.c.h.b16 %v1970
    %v2292 = vunpack.c.l.b16 %v1971
    %v2293 = vunpack.c.h.b16 %v1971
    %v2294 = vunpack.c.l.b16 %v1972
    %v2295 = vunpack.c.h.b16 %v1972
    %v2296 = vunpack.c.l.b16 %v1973
    %v2297 = vunpack.c.l.b16 %v1974
    %v2298 = vunpack.c.h.b16 %v1974
    %v2299 = vunpack.c.l.b16 %v1975
    %v2300 = vunpack.c.h.b16 %v1975
    %v2301 = vunpack.c.l.b16 %v1976
    %v2302 = vunpack.c.h.b16 %v1976
    %v2303 = vunpack.c.l.b16 %v1977
    %v2304 = vunpack.c.l.b16 %v1978
    %v2305 = vunpack.c.h.b16 %v1978
    %v2306 = vunpack.c.l.b16 %v1979
    %v2307 = vunpack.c.h.b16 %v1979
    %v2308 = vunpack.c.l.b16 %v1980
    %v2309 = vunpack.c.h.b16 %v1980
    %v2310 = vunpack.c.l.b16 %v1981
    %v2311 = vunpack.c.l.b16 %v1982
    %v2312 = vunpack.c.h.b16 %v1982
    %v2313 = vunpack.c.l.b16 %v1983
    %v2314 = vunpack.c.h.b16 %v1983
    %v2315 = vunpack.c.l.b16 %v1984
    %v2316 = vunpack.c.h.b16 %v1984
    %v2317 = vunpack.c.l.b16 %v1985
    %v2318 = vunpack.c.l.b16 %v1986
    %v2319 = vunpack.c.h.b16 %v1986
    %v2320 = vunpack.c.l.b16 %v1987
    %v2321 = vunpack.c.h.b16 %v1987
    %v2322 = vunpack.c.l.b16 %v1988
    %v2323 = vunpack.c.h.b16 %v1988
    %v2324 = vunpack.c.l.b16 %v1989
    %v2325 = vunpack.c.l.b16 %v1990
    %v2326 = vunpack.c.h.b16 %v1990
    %v2327 = vunpack.c.l.b16 %v1991
    %v2328 = vunpack.c.h.b16 %v1991
    %v2329 = vunpack.c.l.b16 %v1992
    %v2330 = vunpack.c.h.b16 %v1992
    %v2331 = vunpack.c.l.b16 %v1993
    %v2332 = vunpack.c.l.b16 %v1994
    %v2333 = vunpack.c.h.b16 %v1994
    %v2334 = vunpack.c.l.b16 %v1995
    %v2335 = vunpack.c.h.b16 %v1995
    %v2336 = vunpack.c.l.b16 %v1996
    %v2337 = vunpack.c.h.b16 %v1996
    %v2338 = vunpack.c.l.b16 %v1997
    %v2339 = vunpack.c.l.b16 %v1998
    %v2340 = vunpack.c.h.b16 %v1998
    %v2341 = vunpack.c.l.b16 %v1999
    %v2342 = vunpack.c.h.b16 %v1999
    %v2343 = vunpack.c.l.b16 %v2000
    %v2344 = vunpack.c.h.b16 %v2000
    %v2345 = vunpack.c.l.b16 %v2001
    %v2346 = vunpack.c.l.b16 %v2002
    %v2347 = vunpack.c.h.b16 %v2002
    %v2348 = vunpack.c.l.b16 %v2003
    %v2349 = vunpack.c.h.b16 %v2003
    %v2350 = vunpack.c.l.b16 %v2004
    %v2351 = vunpack.c.h.b16 %v2004
    %v2352 = vunpack.c.l.b16 %v2005
    %v2353 = vunpack.c.l.b16 %v2006
    %v2354 = vunpack.c.h.b16 %v2006
    %v2355 = vunpack.c.l.b16 %v2007
    %v2356 = vunpack.c.h.b16 %v2007
    %v2357 = vunpack.c.l.b16 %v2008
    %v2358 = vunpack.c.h.b16 %v2008
    %v2359 = vunpack.c.l.b16 %v2009
    %v2360 = vunpack.c.l.b16 %v2010
    %v2361 = vunpack.c.h.b16 %v2010
    %v2362 = vunpack.c.l.b16 %v2011
    %v2363 = vunpack.c.h.b16 %v2011
    %v2364 = vunpack.c.l.b16 %v2012
    %v2365 = vunpack.c.h.b16 %v2012
    %v2366 = vunpack.c.l.b16 %v2013
    %v2367 = vunpack.c.l.b16 %v2014
    %v2368 = vunpack.c.h.b16 %v2014
    %v2369 = vunpack.c.l.b16 %v2015
    %v2370 = vunpack.c.h.b16 %v2015
    %v2371 = vunpack.c.l.b16 %v2016
    %v2372 = vunpack.c.h.b16 %v2016
    %v2373 = vunpack.c.l.b16 %v2017
    %v2374 = vunpack.c.l.b16 %v2018
    %v2375 = vunpack.c.h.b16 %v2018
    %v2376 = vunpack.c.l.b16 %v2019
    %v2377 = vunpack.c.h.b16 %v2019
    %v2378 = vunpack.c.l.b16 %v2020
    %v2379 = vunpack.c.h.b16 %v2020
    %v2380 = vunpack.c.l.b16 %v2021
    %v2381 = vunpack.c.l.b16 %v2022
    %v2382 = vunpack.c.h.b16 %v2022
    %v2383 = vunpack.c.l.b16 %v2023
    %v2384 = vunpack.c.h.b16 %v2023
    %v2385 = vunpack.c.l.b16 %v2024
    %v2386 = vunpack.c.h.b16 %v2024
    %v2387 = vunpack.c.l.b16 %v2025
    %v2388 = vunpack.c.l.b16 %v2026
    %v2389 = vunpack.c.h.b16 %v2026
    %v2390 = vunpack.c.l.b16 %v2027
    %v2391 = vunpack.c.h.b16 %v2027
    %v2392 = vunpack.c.l.b16 %v2028
    %v2393 = vunpack.c.h.b16 %v2028
    %v2394 = vunpack.c.l.b16 %v2029
    %v2395 = vunpack.c.l.b16 %v2030
    %v2396 = vunpack.c.h.b16 %v2030
    %v2397 = vunpack.c.l.b16 %v2031
    %v2398 = vunpack.c.h.b16 %v2031
    %v2399 = vunpack.c.l.b16 %v2032
    %v2400 = vunpack.c.h.b16 %v2032
    %v2401 = vunpack.c.l.b16 %v2033
    %v2402 = vpack.c.b16 %v2185, %v2178
    %v2403 = vpack.c.b16 %v2186, %v2179
    %v2404 = vpack.c.b16 %v2187, %v2180
    %v2405 = vpack.c.b16 %v2188, %v2181
    %v2406 = vpack.c.b16 %v2189, %v2182
    %v2407 = vpack.c.b16 %v2190, %v2183
    %v2408 = vpack.c.b16 %v2191, %v2184
    %v2409 = vpack.c.b16 %v2199, %v2192
    %v2410 = vpack.c.b16 %v2200, %v2193
    %v2411 = vpack.c.b16 %v2201, %v2194
    %v2412 = vpack.c.b16 %v2202, %v2195
    %v2413 = vpack.c.b16 %v2203, %v2196
    %v2414 = vpack.c.b16 %v2204, %v2197
    %v2415 = vpack.c.b16 %v2205, %v2198
    %v2416 = vpack.c.b16 %v2213, %v2206
    %v2417 = vpack.c.b16 %v2214, %v2207
    %v2418 = vpack.c.b16 %v2215, %v2208
    %v2419 = vpack.c.b16 %v2216, %v2209
    %v2420 = vpack.c.b16 %v2217, %v2210
    %v2421 = vpack.c.b16 %v2218, %v2211
    %v2422 = vpack.c.b16 %v2219, %v2212
    %v2423 = vpack.c.b16 %v2227, %v2220
    %v2424 = vpack.c.b16 %v2228, %v2221
    %v2425 = vpack.c.b16 %v2229, %v2222
    %v2426 = vpack.c.b16 %v2230, %v2223
    %v2427 = vpack.c.b16 %v2231, %v2224
    %v2428 = vpack.c.b16 %v2232, %v2225
    %v2429 = vpack.c.b16 %v2233, %v2226
    %v2430 = vpack.c.b16 %v2241, %v2234
    %v2431 = vpack.c.b16 %v2242, %v2235
    %v2432 = vpack.c.b16 %v2243, %v2236
    %v2433 = vpack.c.b16 %v2244, %v2237
    %v2434 = vpack.c.b16 %v2245, %v2238
    %v2435 = vpack.c.b16 %v2246, %v2239
    %v2436 = vpack.c.b16 %v2247, %v2240
    %v2437 = vpack.c.b16 %v2255, %v2248
    %v2438 = vpack.c.b16 %v2256, %v2249
    %v2439 = vpack.c.b16 %v2257, %v2250
    %v2440 = vpack.c.b16 %v2258, %v2251
    %v2441 = vpack.c.b16 %v2259, %v2252
    %v2442 = vpack.c.b16 %v2260, %v2253
    %v2443 = vpack.c.b16 %v2261, %v2254
    %v2444 = vpack.c.b16 %v2269, %v2262
    %v2445 = vpack.c.b16 %v2270, %v2263
    %v2446 = vpack.c.b16 %v2271, %v2264
    %v2447 = vpack.c.b16 %v2272, %v2265
    %v2448 = vpack.c.b16 %v2273, %v2266
    %v2449 = vpack.c.b16 %v2274, %v2267
    %v2450 = vpack.c.b16 %v2275, %v2268
    %v2451 = vpack.c.b16 %v2283, %v2276
    %v2452 = vpack.c.b16 %v2284, %v2277
    %v2453 = vpack.c.b16 %v2285, %v2278
    %v2454 = vpack.c.b16 %v2286, %v2279
    %v2455 = vpack.c.b16 %v2287, %v2280
    %v2456 = vpack.c.b16 %v2288, %v2281
    %v2457 = vpack.c.b16 %v2289, %v2282
    %v2458 = vpack.c.b16 %v2297, %v2290
    %v2459 = vpack.c.b16 %v2298, %v2291
    %v2460 = vpack.c.b16 %v2299, %v2292
    %v2461 = vpack.c.b16 %v2300, %v2293
    %v2462 = vpack.c.b16 %v2301, %v2294
    %v2463 = vpack.c.b16 %v2302, %v2295
    %v2464 = vpack.c.b16 %v2303, %v2296
    %v2465 = vpack.c.b16 %v2311, %v2304
    %v2466 = vpack.c.b16 %v2312, %v2305
    %v2467 = vpack.c.b16 %v2313, %v2306
    %v2468 = vpack.c.b16 %v2314, %v2307
    %v2469 = vpack.c.b16 %v2315, %v2308
    %v2470 = vpack.c.b16 %v2316, %v2309
    %v2471 = vpack.c.b16 %v2317, %v2310
    %v2472 = vpack.c.b16 %v2325, %v2318
    %v2473 = vpack.c.b16 %v2326, %v2319
    %v2474 = vpack.c.b16 %v2327, %v2320
    %v2475 = vpack.c.b16 %v2328, %v2321
    %v2476 = vpack.c.b16 %v2329, %v2322
    %v2477 = vpack.c.b16 %v2330, %v2323
    %v2478 = vpack.c.b16 %v2331, %v2324
    %v2479 = vpack.c.b16 %v2339, %v2332
    %v2480 = vpack.c.b16 %v2340, %v2333
    %v2481 = vpack.c.b16 %v2341, %v2334
    %v2482 = vpack.c.b16 %v2342, %v2335
    %v2483 = vpack.c.b16 %v2343, %v2336
    %v2484 = vpack.c.b16 %v2344, %v2337
    %v2485 = vpack.c.b16 %v2345, %v2338
    %v2486 = vpack.c.b16 %v2353, %v2346
    %v2487 = vpack.c.b16 %v2354, %v2347
    %v2488 = vpack.c.b16 %v2355, %v2348
    %v2489 = vpack.c.b16 %v2356, %v2349
    %v2490 = vpack.c.b16 %v2357, %v2350
    %v2491 = vpack.c.b16 %v2358, %v2351
    %v2492 = vpack.c.b16 %v2359, %v2352
    %v2493 = vpack.c.b16 %v2367, %v2360
    %v2494 = vpack.c.b16 %v2368, %v2361
    %v2495 = vpack.c.b16 %v2369, %v2362
    %v2496 = vpack.c.b16 %v2370, %v2363
    %v2497 = vpack.c.b16 %v2371, %v2364
    %v2498 = vpack.c.b16 %v2372, %v2365
    %v2499 = vpack.c.b16 %v2373, %v2366
    %v2500 = vpack.c.b16 %v2381, %v2374
    %v2501 = vpack.c.b16 %v2382, %v2375
    %v2502 = vpack.c.b16 %v2383, %v2376
    %v2503 = vpack.c.b16 %v2384, %v2377
    %v2504 = vpack.c.b16 %v2385, %v2378
    %v2505 = vpack.c.b16 %v2386, %v2379
    %v2506 = vpack.c.b16 %v2387, %v2380
    %v2507 = vpack.c.b16 %v2395, %v2388
    %v2508 = vpack.c.b16 %v2396, %v2389
    %v2509 = vpack.c.b16 %v2397, %v2390
    %v2510 = vpack.c.b16 %v2398, %v2391
    %v2511 = vpack.c.b16 %v2399, %v2392
    %v2512 = vpack.c.b16 %v2400, %v2393
    %v2513 = vpack.c.b16 %v2401, %v2394
    %2626 = vmatpush.bf16.msra.mxu0 %v2451
    %2627 = vmatpush.bf16.msra.mxu0 %v2444
    %2628 = vmatpush.bf16.msra.mxu0 %v2437
    %2629 = vmatpush.bf16.msra.mxu0 %v2430
    %2630 = vmatpush.bf16.msra.mxu0 %v2423
    %2631 = vmatpush.bf16.msra.mxu0 %v2416
    %2632 = vmatpush.bf16.msra.mxu0 %v2409
    %2633 = vmatpush.bf16.msra.mxu0 %v2402
    %2634 = vmatmul.bf16.gmra.mxu0 %v1904
    %v2635 = vpop.f32.mrf.mxu0
    %v2636 = vadd.f32 %v2036, %v2635
    %v2637 = vpop.f32.mrf.mxu0
    %v2638 = vadd.f32 %v2036, %v2637
    %2639 = vdwg.mxu0
    %2640 = vmatpush.bf16.msra.mxu0 %v2507
    %2641 = vmatpush.bf16.msra.mxu0 %v2500
    %2642 = vmatpush.bf16.msra.mxu0 %v2493
    %2643 = vmatpush.bf16.msra.mxu0 %v2486
    %2644 = vmatpush.bf16.msra.mxu0 %v2479
    %2645 = vmatpush.bf16.msra.mxu0 %v2472
    %2646 = vmatpush.bf16.msra.mxu0 %v2465
    %2647 = vmatpush.bf16.msra.mxu0 %v2458
    %2648 = vmatmul.bf16.gmra.mxu0 %v1905
    %v2649 = vpop.f32.mrf.mxu0
    %v2650 = vadd.f32 %v2636, %v2649
    %v2651 = vpop.f32.mrf.mxu0
    %v2652 = vadd.f32 %v2638, %v2651
    %2653 = vdwg.mxu0
    %2654 = vmatpush.bf16.msra.mxu0 %v2452
    %2655 = vmatpush.bf16.msra.mxu0 %v2445
    %2656 = vmatpush.bf16.msra.mxu0 %v2438
    %2657 = vmatpush.bf16.msra.mxu0 %v2431
    %2658 = vmatpush.bf16.msra.mxu0 %v2424
    %2659 = vmatpush.bf16.msra.mxu0 %v2417
    %2660 = vmatpush.bf16.msra.mxu0 %v2410
    %2661 = vmatpush.bf16.msra.mxu0 %v2403
    %2662 = vmatmul.bf16.gmra.mxu0 %v1904
    %v2663 = vpop.f32.mrf.mxu0
    %v2664 = vadd.f32 %v2037, %v2663
    %v2665 = vpop.f32.mrf.mxu0
    %v2666 = vadd.f32 %v2037, %v2665
    %2667 = vdwg.mxu0
    %2668 = vmatpush.bf16.msra.mxu0 %v2508
    %2669 = vmatpush.bf16.msra.mxu0 %v2501
    %2670 = vmatpush.bf16.msra.mxu0 %v2494
    %2671 = vmatpush.bf16.msra.mxu0 %v2487
    %2672 = vmatpush.bf16.msra.mxu0 %v2480
    %2673 = vmatpush.bf16.msra.mxu0 %v2473
    %2674 = vmatpush.bf16.msra.mxu0 %v2466
    %2675 = vmatpush.bf16.msra.mxu0 %v2459
    %2676 = vmatmul.bf16.gmra.mxu0 %v1905
    %v2677 = vpop.f32.mrf.mxu0
    %v2678 = vadd.f32 %v2664, %v2677
    %v2679 = vpop.f32.mrf.mxu0
    %v2680 = vadd.f32 %v2666, %v2679
    %2681 = vdwg.mxu0
    %2682 = vmatpush.bf16.msra.mxu0 %v2453
    %2683 = vmatpush.bf16.msra.mxu0 %v2446
    %2684 = vmatpush.bf16.msra.mxu0 %v2439
    %2685 = vmatpush.bf16.msra.mxu0 %v2432
    %2686 = vmatpush.bf16.msra.mxu0 %v2425
    %2687 = vmatpush.bf16.msra.mxu0 %v2418
    %2688 = vmatpush.bf16.msra.mxu0 %v2411
    %2689 = vmatpush.bf16.msra.mxu0 %v2404
    %2690 = vmatmul.bf16.gmra.mxu0 %v1904
    %v2691 = vpop.f32.mrf.mxu0
    %v2692 = vadd.f32 %v2038, %v2691
    %v2693 = vpop.f32.mrf.mxu0
    %v2694 = vadd.f32 %v2038, %v2693
    %2695 = vdwg.mxu0
    %2696 = vmatpush.bf16.msra.mxu0 %v2509
    %2697 = vmatpush.bf16.msra.mxu0 %v2502
    %2698 = vmatpush.bf16.msra.mxu0 %v2495
    %2699 = vmatpush.bf16.msra.mxu0 %v2488
    %2700 = vmatpush.bf16.msra.mxu0 %v2481
    %2701 = vmatpush.bf16.msra.mxu0 %v2474
    %2702 = vmatpush.bf16.msra.mxu0 %v2467
    %2703 = vmatpush.bf16.msra.mxu0 %v2460
    %2704 = vmatmul.bf16.gmra.mxu0 %v1905
    %v2705 = vpop.f32.mrf.mxu0
    %v2706 = vadd.f32 %v2692, %v2705
    %v2707 = vpop.f32.mrf.mxu0
    %v2708 = vadd.f32 %v2694, %v2707
    %2709 = vdwg.mxu0
    %2710 = vmatpush.bf16.msra.mxu0 %v2454
    %2711 = vmatpush.bf16.msra.mxu0 %v2447
    %2712 = vmatpush.bf16.msra.mxu0 %v2440
    %2713 = vmatpush.bf16.msra.mxu0 %v2433
    %2714 = vmatpush.bf16.msra.mxu0 %v2426
    %2715 = vmatpush.bf16.msra.mxu0 %v2419
    %2716 = vmatpush.bf16.msra.mxu0 %v2412
    %2717 = vmatpush.bf16.msra.mxu0 %v2405
    %2718 = vmatmul.bf16.gmra.mxu0 %v1904
    %v2719 = vpop.f32.mrf.mxu0
    %v2720 = vadd.f32 %v2039, %v2719
    %v2721 = vpop.f32.mrf.mxu0
    %v2722 = vadd.f32 %v2039, %v2721
    %2723 = vdwg.mxu0
    %2724 = vmatpush.bf16.msra.mxu0 %v2510
    %2725 = vmatpush.bf16.msra.mxu0 %v2503
    %2726 = vmatpush.bf16.msra.mxu0 %v2496
    %2727 = vmatpush.bf16.msra.mxu0 %v2489
    %2728 = vmatpush.bf16.msra.mxu0 %v2482
    %2729 = vmatpush.bf16.msra.mxu0 %v2475
    %2730 = vmatpush.bf16.msra.mxu0 %v2468
    %2731 = vmatpush.bf16.msra.mxu0 %v2461
    %2732 = vmatmul.bf16.gmra.mxu0 %v1905
    %v2733 = vpop.f32.mrf.mxu0
    %v2734 = vadd.f32 %v2720, %v2733
    %v2735 = vpop.f32.mrf.mxu0
    %v2736 = vadd.f32 %v2722, %v2735
    %2737 = vdwg.mxu0
    %2738 = vmatpush.bf16.msra.mxu0 %v2455
    %2739 = vmatpush.bf16.msra.mxu0 %v2448
    %2740 = vmatpush.bf16.msra.mxu0 %v2441
    %2741 = vmatpush.bf16.msra.mxu0 %v2434
    %2742 = vmatpush.bf16.msra.mxu0 %v2427
    %2743 = vmatpush.bf16.msra.mxu0 %v2420
    %2744 = vmatpush.bf16.msra.mxu0 %v2413
    %2745 = vmatpush.bf16.msra.mxu0 %v2406
    %2746 = vmatmul.bf16.gmra.mxu0 %v1904
    %v2747 = vpop.f32.mrf.mxu0
    %v2748 = vadd.f32 %v2040, %v2747
    %v2749 = vpop.f32.mrf.mxu0
    %v2750 = vadd.f32 %v2040, %v2749
    %2751 = vdwg.mxu0
    %2752 = vmatpush.bf16.msra.mxu0 %v2511
    %2753 = vmatpush.bf16.msra.mxu0 %v2504
    %2754 = vmatpush.bf16.msra.mxu0 %v2497
    %2755 = vmatpush.bf16.msra.mxu0 %v2490
    %2756 = vmatpush.bf16.msra.mxu0 %v2483
    %2757 = vmatpush.bf16.msra.mxu0 %v2476
    %2758 = vmatpush.bf16.msra.mxu0 %v2469
    %2759 = vmatpush.bf16.msra.mxu0 %v2462
    %2760 = vmatmul.bf16.gmra.mxu0 %v1905
    %v2761 = vpop.f32.mrf.mxu0
    %v2762 = vadd.f32 %v2748, %v2761
    %v2763 = vpop.f32.mrf.mxu0
    %v2764 = vadd.f32 %v2750, %v2763
    %2765 = vdwg.mxu0
    %2766 = vmatpush.bf16.msra.mxu0 %v2456
    %2767 = vmatpush.bf16.msra.mxu0 %v2449
    %2768 = vmatpush.bf16.msra.mxu0 %v2442
    %2769 = vmatpush.bf16.msra.mxu0 %v2435
    %2770 = vmatpush.bf16.msra.mxu0 %v2428
    %2771 = vmatpush.bf16.msra.mxu0 %v2421
    %2772 = vmatpush.bf16.msra.mxu0 %v2414
    %2773 = vmatpush.bf16.msra.mxu0 %v2407
    %2774 = vmatmul.bf16.gmra.mxu0 %v1904
    %v2775 = vpop.f32.mrf.mxu0
    %v2776 = vadd.f32 %v2041, %v2775
    %v2777 = vpop.f32.mrf.mxu0
    %v2778 = vadd.f32 %v2041, %v2777
    %2779 = vdwg.mxu0
    %2780 = vmatpush.bf16.msra.mxu0 %v2512
    %2781 = vmatpush.bf16.msra.mxu0 %v2505
    %2782 = vmatpush.bf16.msra.mxu0 %v2498
    %2783 = vmatpush.bf16.msra.mxu0 %v2491
    %2784 = vmatpush.bf16.msra.mxu0 %v2484
    %2785 = vmatpush.bf16.msra.mxu0 %v2477
    %2786 = vmatpush.bf16.msra.mxu0 %v2470
    %2787 = vmatpush.bf16.msra.mxu0 %v2463
    %2788 = vmatmul.bf16.gmra.mxu0 %v1905
    %v2789 = vpop.f32.mrf.mxu0
    %v2790 = vadd.f32 %v2776, %v2789
    %v2791 = vpop.f32.mrf.mxu0
    %v2792 = vadd.f32 %v2778, %v2791
    %2793 = vdwg.mxu0
    %2794 = vmatpush.bf16.msra.mxu0 %v2457
    %2795 = vmatpush.bf16.msra.mxu0 %v2450
    %2796 = vmatpush.bf16.msra.mxu0 %v2443
    %2797 = vmatpush.bf16.msra.mxu0 %v2436
    %2798 = vmatpush.bf16.msra.mxu0 %v2429
    %2799 = vmatpush.bf16.msra.mxu0 %v2422
    %2800 = vmatpush.bf16.msra.mxu0 %v2415
    %2801 = vmatpush.bf16.msra.mxu0 %v2408
    %2802 = vmatmul.bf16.gmra.mxu0 %v1904
    %v2803 = vpop.f32.mrf.mxu0
    %v2804 = vadd.f32 %v2042, %v2803
    %v2805 = vpop.f32.mrf.mxu0
    %v2806 = vadd.f32 %v2042, %v2805
    %2807 = vdwg.mxu0
    %2808 = vmatpush.bf16.msra.mxu0 %v2513
    %2809 = vmatpush.bf16.msra.mxu0 %v2506
    %2810 = vmatpush.bf16.msra.mxu0 %v2499
    %2811 = vmatpush.bf16.msra.mxu0 %v2492
    %2812 = vmatpush.bf16.msra.mxu0 %v2485
    %2813 = vmatpush.bf16.msra.mxu0 %v2478
    %2814 = vmatpush.bf16.msra.mxu0 %v2471
    %2815 = vmatpush.bf16.msra.mxu0 %v2464
    %2816 = vmatmul.bf16.gmra.mxu0 %v1905
    %v2817 = vpop.f32.mrf.mxu0
    %v2818 = vadd.f32 %v2804, %v2817
    %v2819 = vpop.f32.mrf.mxu0
    %v2820 = vadd.f32 %v2806, %v2819
    %2821 = vdwg.mxu0
    %v2822 = vxor.u32 %v2650, 2147483648
    %v2823 = vxor.u32 %v2678, 2147483648
    %v2824 = vxor.u32 %v2706, 2147483648
    %v2825 = vxor.u32 %v2734, 2147483648
    %v2826 = vxor.u32 %v2762, 2147483648
    %v2827 = vxor.u32 %v2790, 2147483648
    %v2828 = vxor.u32 %v2818, 2147483648
    %v2829 = vxor.u32 %v2652, 2147483648
    %v2830 = vxor.u32 %v2680, 2147483648
    %v2831 = vxor.u32 %v2708, 2147483648
    %v2832 = vxor.u32 %v2736, 2147483648
    %v2833 = vxor.u32 %v2764, 2147483648
    %v2834 = vxor.u32 %v2792, 2147483648
    %v2835 = vxor.u32 %v2820, 2147483648
    %v2836 = vmul.f32 %v2822, 1.442695
    %v2837 = vpow.pop %v2836
    %v2838 = vmul.f32 %v2823, 1.442695
    %v2839 = vpow.pop %v2838
    %v2840 = vmul.f32 %v2824, 1.442695
    %v2841 = vpow.pop %v2840
    %v2842 = vmul.f32 %v2825, 1.442695
    %v2843 = vpow.pop %v2842
    %v2844 = vmul.f32 %v2826, 1.442695
    %v2845 = vpow.pop %v2844
    %v2846 = vmul.f32 %v2827, 1.442695
    %v2847 = vpow.pop %v2846
    %v2848 = vmul.f32 %v2828, 1.442695
    %v2849 = vpow.pop %v2848
    %v2850 = vmul.f32 %v2829, 1.442695
    %v2851 = vpow.pop %v2850
    %v2852 = vmul.f32 %v2830, 1.442695
    %v2853 = vpow.pop %v2852
    %v2854 = vmul.f32 %v2831, 1.442695
    %v2855 = vpow.pop %v2854
    %v2856 = vmul.f32 %v2832, 1.442695
    %v2857 = vpow.pop %v2856
    %v2858 = vmul.f32 %v2833, 1.442695
    %v2859 = vpow.pop %v2858
    %v2860 = vmul.f32 %v2834, 1.442695
    %v2861 = vpow.pop %v2860
    %v2862 = vmul.f32 %v2835, 1.442695
    %v2863 = vpow.pop %v2862
    %v2864 = vadd.f32 %v2837, 1.0
    %v2865 = vadd.f32 %v2839, 1.0
    %v2866 = vadd.f32 %v2841, 1.0
    %v2867 = vadd.f32 %v2843, 1.0
    %v2868 = vadd.f32 %v2845, 1.0
    %v2869 = vadd.f32 %v2847, 1.0
    %v2870 = vadd.f32 %v2849, 1.0
    %v2871 = vadd.f32 %v2851, 1.0
    %v2872 = vadd.f32 %v2853, 1.0
    %v2873 = vadd.f32 %v2855, 1.0
    %v2874 = vadd.f32 %v2857, 1.0
    %v2875 = vadd.f32 %v2859, 1.0
    %v2876 = vadd.f32 %v2861, 1.0
    %v2877 = vadd.f32 %v2863, 1.0
    %v2878 = vrcp.pop %v2864
    %v2879 = vmul.f32 %v2864, %v2878
    %v2880 = vsub.f32 1.0, %v2879
    %v2881 = vmul.f32 %v2878, %v2880
    %v2882 = vadd.f32 %v2878, %v2881
    %vm2883 = vweird.f32 %v2864
    %vm2884 = vweird.f32 %v2878
    %vm2885 = vmor %vm2883, %vm2884
    %v2886 = vsel %vm2885, %v2878, %v2882
    %v2887 = vand.u32 2147483647, %v2864
    %vm2888 = vcmp.eq.f32.partialorder %v2887, 8.507059e+37
    %v2889 = vand.u32 %v2864, 2147483648
    %v2890 = vor.u32 1.1754944e-38, %v2889
    %v2891 = vsel %vm2888, %v2890, %v2886
    %v2892 = vmul.f32 1.0, %v2891
    %v2893 = vrcp.pop %v2865
    %v2894 = vmul.f32 %v2865, %v2893
    %v2895 = vsub.f32 1.0, %v2894
    %v2896 = vmul.f32 %v2893, %v2895
    %v2897 = vadd.f32 %v2893, %v2896
    %vm2898 = vweird.f32 %v2865
    %vm2899 = vweird.f32 %v2893
    %vm2900 = vmor %vm2898, %vm2899
    %v2901 = vsel %vm2900, %v2893, %v2897
    %v2902 = vand.u32 2147483647, %v2865
    %vm2903 = vcmp.eq.f32.partialorder %v2902, 8.507059e+37
    %v2904 = vand.u32 %v2865, 2147483648
    %v2905 = vor.u32 1.1754944e-38, %v2904
    %v2906 = vsel %vm2903, %v2905, %v2901
    %v2907 = vmul.f32 1.0, %v2906
    %v2908 = vrcp.pop %v2866
    %v2909 = vmul.f32 %v2866, %v2908
    %v2910 = vsub.f32 1.0, %v2909
    %v2911 = vmul.f32 %v2908, %v2910
    %v2912 = vadd.f32 %v2908, %v2911
    %vm2913 = vweird.f32 %v2866
    %vm2914 = vweird.f32 %v2908
    %vm2915 = vmor %vm2913, %vm2914
    %v2916 = vsel %vm2915, %v2908, %v2912
    %v2917 = vand.u32 2147483647, %v2866
    %vm2918 = vcmp.eq.f32.partialorder %v2917, 8.507059e+37
    %v2919 = vand.u32 %v2866, 2147483648
    %v2920 = vor.u32 1.1754944e-38, %v2919
    %v2921 = vsel %vm2918, %v2920, %v2916
    %v2922 = vmul.f32 1.0, %v2921
    %v2923 = vrcp.pop %v2867
    %v2924 = vmul.f32 %v2867, %v2923
    %v2925 = vsub.f32 1.0, %v2924
    %v2926 = vmul.f32 %v2923, %v2925
    %v2927 = vadd.f32 %v2923, %v2926
    %vm2928 = vweird.f32 %v2867
    %vm2929 = vweird.f32 %v2923
    %vm2930 = vmor %vm2928, %vm2929
    %v2931 = vsel %vm2930, %v2923, %v2927
    %v2932 = vand.u32 2147483647, %v2867
    %vm2933 = vcmp.eq.f32.partialorder %v2932, 8.507059e+37
    %v2934 = vand.u32 %v2867, 2147483648
    %v2935 = vor.u32 1.1754944e-38, %v2934
    %v2936 = vsel %vm2933, %v2935, %v2931
    %v2937 = vmul.f32 1.0, %v2936
    %v2938 = vrcp.pop %v2868
    %v2939 = vmul.f32 %v2868, %v2938
    %v2940 = vsub.f32 1.0, %v2939
    %v2941 = vmul.f32 %v2938, %v2940
    %v2942 = vadd.f32 %v2938, %v2941
    %vm2943 = vweird.f32 %v2868
    %vm2944 = vweird.f32 %v2938
    %vm2945 = vmor %vm2943, %vm2944
    %v2946 = vsel %vm2945, %v2938, %v2942
    %v2947 = vand.u32 2147483647, %v2868
    %vm2948 = vcmp.eq.f32.partialorder %v2947, 8.507059e+37
    %v2949 = vand.u32 %v2868, 2147483648
    %v2950 = vor.u32 1.1754944e-38, %v2949
    %v2951 = vsel %vm2948, %v2950, %v2946
    %v2952 = vmul.f32 1.0, %v2951
    %v2953 = vrcp.pop %v2869
    %v2954 = vmul.f32 %v2869, %v2953
    %v2955 = vsub.f32 1.0, %v2954
    %v2956 = vmul.f32 %v2953, %v2955
    %v2957 = vadd.f32 %v2953, %v2956
    %vm2958 = vweird.f32 %v2869
    %vm2959 = vweird.f32 %v2953
    %vm2960 = vmor %vm2958, %vm2959
    %v2961 = vsel %vm2960, %v2953, %v2957
    %v2962 = vand.u32 2147483647, %v2869
    %vm2963 = vcmp.eq.f32.partialorder %v2962, 8.507059e+37
    %v2964 = vand.u32 %v2869, 2147483648
    %v2965 = vor.u32 1.1754944e-38, %v2964
    %v2966 = vsel %vm2963, %v2965, %v2961
    %v2967 = vmul.f32 1.0, %v2966
    %v2968 = vrcp.pop %v2870
    %v2969 = vmul.f32 %v2870, %v2968
    %v2970 = vsub.f32 1.0, %v2969
    %v2971 = vmul.f32 %v2968, %v2970
    %v2972 = vadd.f32 %v2968, %v2971
    %vm2973 = vweird.f32 %v2870
    %vm2974 = vweird.f32 %v2968
    %vm2975 = vmor %vm2973, %vm2974
    %v2976 = vsel %vm2975, %v2968, %v2972
    %v2977 = vand.u32 2147483647, %v2870
    %vm2978 = vcmp.eq.f32.partialorder %v2977, 8.507059e+37
    %v2979 = vand.u32 %v2870, 2147483648
    %v2980 = vor.u32 1.1754944e-38, %v2979
    %v2981 = vsel %vm2978, %v2980, %v2976
    %v2982 = vmul.f32 1.0, %v2981
    %v2983 = vrcp.pop %v2871
    %v2984 = vmul.f32 %v2871, %v2983
    %v2985 = vsub.f32 1.0, %v2984
    %v2986 = vmul.f32 %v2983, %v2985
    %v2987 = vadd.f32 %v2983, %v2986
    %vm2988 = vweird.f32 %v2871
    %vm2989 = vweird.f32 %v2983
    %vm2990 = vmor %vm2988, %vm2989
    %v2991 = vsel %vm2990, %v2983, %v2987
    %v2992 = vand.u32 2147483647, %v2871
    %vm2993 = vcmp.eq.f32.partialorder %v2992, 8.507059e+37
    %v2994 = vand.u32 %v2871, 2147483648
    %v2995 = vor.u32 1.1754944e-38, %v2994
    %v2996 = vsel %vm2993, %v2995, %v2991
    %v2997 = vmul.f32 1.0, %v2996
    %v2998 = vrcp.pop %v2872
    %v2999 = vmul.f32 %v2872, %v2998
    %v3000 = vsub.f32 1.0, %v2999
    %v3001 = vmul.f32 %v2998, %v3000
    %v3002 = vadd.f32 %v2998, %v3001
    %vm3003 = vweird.f32 %v2872
    %vm3004 = vweird.f32 %v2998
    %vm3005 = vmor %vm3003, %vm3004
    %v3006 = vsel %vm3005, %v2998, %v3002
    %v3007 = vand.u32 2147483647, %v2872
    %vm3008 = vcmp.eq.f32.partialorder %v3007, 8.507059e+37
    %v3009 = vand.u32 %v2872, 2147483648
    %v3010 = vor.u32 1.1754944e-38, %v3009
    %v3011 = vsel %vm3008, %v3010, %v3006
    %v3012 = vmul.f32 1.0, %v3011
    %v3013 = vrcp.pop %v2873
    %v3014 = vmul.f32 %v2873, %v3013
    %v3015 = vsub.f32 1.0, %v3014
    %v3016 = vmul.f32 %v3013, %v3015
    %v3017 = vadd.f32 %v3013, %v3016
    %vm3018 = vweird.f32 %v2873
    %vm3019 = vweird.f32 %v3013
    %vm3020 = vmor %vm3018, %vm3019
    %v3021 = vsel %vm3020, %v3013, %v3017
    %v3022 = vand.u32 2147483647, %v2873
    %vm3023 = vcmp.eq.f32.partialorder %v3022, 8.507059e+37
    %v3024 = vand.u32 %v2873, 2147483648
    %v3025 = vor.u32 1.1754944e-38, %v3024
    %v3026 = vsel %vm3023, %v3025, %v3021
    %v3027 = vmul.f32 1.0, %v3026
    %v3028 = vrcp.pop %v2874
    %v3029 = vmul.f32 %v2874, %v3028
    %v3030 = vsub.f32 1.0, %v3029
    %v3031 = vmul.f32 %v3028, %v3030
    %v3032 = vadd.f32 %v3028, %v3031
    %vm3033 = vweird.f32 %v2874
    %vm3034 = vweird.f32 %v3028
    %vm3035 = vmor %vm3033, %vm3034
    %v3036 = vsel %vm3035, %v3028, %v3032
    %v3037 = vand.u32 2147483647, %v2874
    %vm3038 = vcmp.eq.f32.partialorder %v3037, 8.507059e+37
    %v3039 = vand.u32 %v2874, 2147483648
    %v3040 = vor.u32 1.1754944e-38, %v3039
    %v3041 = vsel %vm3038, %v3040, %v3036
    %v3042 = vmul.f32 1.0, %v3041
    %v3043 = vrcp.pop %v2875
    %v3044 = vmul.f32 %v2875, %v3043
    %v3045 = vsub.f32 1.0, %v3044
    %v3046 = vmul.f32 %v3043, %v3045
    %v3047 = vadd.f32 %v3043, %v3046
    %vm3048 = vweird.f32 %v2875
    %vm3049 = vweird.f32 %v3043
    %vm3050 = vmor %vm3048, %vm3049
    %v3051 = vsel %vm3050, %v3043, %v3047
    %v3052 = vand.u32 2147483647, %v2875
    %vm3053 = vcmp.eq.f32.partialorder %v3052, 8.507059e+37
    %v3054 = vand.u32 %v2875, 2147483648
    %v3055 = vor.u32 1.1754944e-38, %v3054
    %v3056 = vsel %vm3053, %v3055, %v3051
    %v3057 = vmul.f32 1.0, %v3056
    %v3058 = vrcp.pop %v2876
    %v3059 = vmul.f32 %v2876, %v3058
    %v3060 = vsub.f32 1.0, %v3059
    %v3061 = vmul.f32 %v3058, %v3060
    %v3062 = vadd.f32 %v3058, %v3061
    %vm3063 = vweird.f32 %v2876
    %vm3064 = vweird.f32 %v3058
    %vm3065 = vmor %vm3063, %vm3064
    %v3066 = vsel %vm3065, %v3058, %v3062
    %v3067 = vand.u32 2147483647, %v2876
    %vm3068 = vcmp.eq.f32.partialorder %v3067, 8.507059e+37
    %v3069 = vand.u32 %v2876, 2147483648
    %v3070 = vor.u32 1.1754944e-38, %v3069
    %v3071 = vsel %vm3068, %v3070, %v3066
    %v3072 = vmul.f32 1.0, %v3071
    %v3073 = vrcp.pop %v2877
    %v3074 = vmul.f32 %v2877, %v3073
    %v3075 = vsub.f32 1.0, %v3074
    %v3076 = vmul.f32 %v3073, %v3075
    %v3077 = vadd.f32 %v3073, %v3076
    %vm3078 = vweird.f32 %v2877
    %vm3079 = vweird.f32 %v3073
    %vm3080 = vmor %vm3078, %vm3079
    %v3081 = vsel %vm3080, %v3073, %v3077
    %v3082 = vand.u32 2147483647, %v2877
    %vm3083 = vcmp.eq.f32.partialorder %v3082, 8.507059e+37
    %v3084 = vand.u32 %v2877, 2147483648
    %v3085 = vor.u32 1.1754944e-38, %v3084
    %v3086 = vsel %vm3083, %v3085, %v3081
    %v3087 = vmul.f32 1.0, %v3086
    %v3088 = vpack.c.bf16 %v2907, %v2892
    %v3089 = vpack.c.bf16 %v2937, %v2922
    %v3090 = vpack.c.bf16 %v2967, %v2952
    %v3091 = vpack.c.bf16 %v2982, %v2982
    %v3092 = vpack.c.bf16 %v3012, %v2997
    %v3093 = vpack.c.bf16 %v3042, %v3027
    %v3094 = vpack.c.bf16 %v3072, %v3057
    %v3095 = vpack.c.bf16 %v3087, %v3087
    %3096 = vst [vmem:[#allocation14] sm:$0xff] %v3088
    %3097 = vst [vmem:[#allocation14 + $0x8] sm:$0xff] %v3089
    %3098 = vst [vmem:[#allocation14 + $0x10] sm:$0xff] %v3090
    %vm3099 = vcmask 125952
    %3100 = vst.msk [vmem:[#allocation14 + $0x18] sm:$0xf] %vm3099, %v3091
    %3101 = vst [vmem:[#allocation14 + $0x1c] sm:$0xff] %v3092
    %3102 = vst [vmem:[#allocation14 + $0x24] sm:$0xff] %v3093
    %3103 = vst [vmem:[#allocation14 + $0x2c] sm:$0xff] %v3094
    %3104 = vst.msk [vmem:[#allocation14 + $0x34] sm:$0xf] %vm3099, %v3095
    // Predicated region
    $region86: #{_lambda_.1} parent=1 // pred_check
      _
    $region87: #{_lambda_.1} parent=1 // pred_check_branch
      %3106 = sbr.rel (0) target = $region89
    $region88: #{_lambda_.1} parent=1 // pred_region
      %3108 = vsyncadd [#allocation4], 0
      %s3109 = sshll.u32 [#allocation14], 4
      %s3110 = int_to_ptr.vmem [resolvable:$true] %s3109
      %s3111 = sshll.u32 %s14, 4
      %s3112 = int_to_ptr.hbm [resolvable:$true] %s3111
      %3117 = dma.vmem_to_hbm [thread:$0]  %s3110, 896, %s3112, [#allocation4], 448, 448, 28
    $region89: #{_lambda_.1} parent=1 // pred_fallthru
      _
    // Predicated region
    $region90: #{_lambda_.1} parent=1 // pred_check
      _
    $region91: #{_lambda_.1} parent=1 // pred_check_branch
      %3119 = sbr.rel (0) target = $region93
    $region92: #{_lambda_.1} parent=1 // pred_region
      _
    $region93: #{_lambda_.1} parent=1 // pred_fallthru
      _
    // Predicated region
    $region94: #{_lambda_.1} parent=1 // pred_check
      _
    $region95: #{_lambda_.1} parent=1 // pred_check_branch
      %3121 = sbr.rel (0) target = $region97
    $region96: #{_lambda_.1} parent=1 // pred_region
      %3123 = dma.done [#allocation4], 896
    $region97: #{_lambda_.1} parent=1 // pred_fallthru
      _
    // Predicated region
    $region98: #{_lambda_.1} parent=1 // pred_check
      _
    $region99: #{_lambda_.1} parent=1 // pred_check_branch
      %3125 = sbr.rel (0) target = $region101
    $region100: #{_lambda_.1} parent=1 // pred_region
      _
    $region101: #{_lambda_.1} parent=1 // pred_fallthru
      _
    %3126 = vsyncpa [#allocation3], 1
    %3127 = vsyncpa [#allocation6], 1
    %3128 = vsyncpa [#allocation9], 1
    %3129 = vsyncpa [#allocation12], 1
    %3130 = vsyncpa [#allocation4], 1

</llo_original>
